<compile_context>
chip_gen: v7x
topology: tpu7x:2x2x1
jax: 0.10.0
libtpu: 0.0.40
codegen_flags: <defaults>
</compile_context>

<pallas_src>
import jax
import jax.numpy as jnp
from jax import lax
from jax.experimental import pallas as pl
from jax.experimental.pallas import tpu as pltpu

_LN_EPS = 1e-5
_BN_EPS = 1e-5
_SOBEL_X = ((-1.0, 0.0, 1.0), (-2.0, 0.0, 2.0), (-1.0, 0.0, 1.0))
_SOBEL_Y = ((-1.0, -2.0, -1.0), (0.0, 0.0, 0.0), (1.0, 2.0, 1.0))


def _make_kernel(H, W, C):
    HW = H * W
    C2 = C + 2

    def kernel(x_ref, col_ref, wm_ref, bm_ref, w1_ref, b1_ref, lng_ref,
               lnb_ref, w2_ref, b2_ref, wc_ref, bn1s_ref, bn1b_ref,
               watt_ref, bn2s_ref, bn2b_ref, out_ref, yscr_ref):
        f32 = jnp.float32
        x = x_ref[0]                                   # (C, HW), lanes = HW
        col = col_ref[...]                             # (1, HW) int32 column idx
        flat = lax.broadcasted_iota(jnp.int32, (1, HW), 1)

        def tap(v, dy, dx):
            """Zero-padded value of v at spatial offset (dy, dx), flat layout."""
            off = dy * W + dx
            shift = (-off) % HW
            r = pltpu.roll(v, shift, axis=1) if shift != 0 else v
            conds = []
            if dx > 0:
                conds.append(col < (W - dx))
            if dx < 0:
                conds.append(col >= (-dx))
            if dy > 0:
                conds.append(flat < (HW - dy * W))
            if dy < 0:
                conds.append(flat >= (-dy) * W)
            if conds:
                ok = conds[0]
                for c in conds[1:]:
                    ok = jnp.logical_and(ok, c)
                r = jnp.where(ok, r, 0.0)
            return r

        # ---- ContextBlock2d (GCNet att-pool + channel_add), lane-dense ----
        mask = jnp.sum(x * wm_ref[...], axis=0, keepdims=True) + bm_ref[...]  # (1, HW)
        m = jnp.max(mask, axis=1, keepdims=True)
        e = jnp.exp(mask - m)
        p = e / jnp.sum(e, axis=1, keepdims=True)          # softmax over space
        ctx = jnp.sum(x * p, axis=1, keepdims=True)        # (C, 1)

        t = jnp.dot(w1_ref[...], ctx, preferred_element_type=f32) + b1_ref[...]
        mu = jnp.mean(t, axis=0, keepdims=True)
        var = jnp.mean((t - mu) ** 2, axis=0, keepdims=True)
        t = (t - mu) * lax.rsqrt(var + _LN_EPS) * lng_ref[...] + lnb_ref[...]
        t = jnp.maximum(t, 0.0)
        t = jnp.dot(w2_ref[...], t, preferred_element_type=f32) + b2_ref[...]  # (C, 1)
        out_gc = x + t                                      # broadcast over HW lanes

        # ---- Sobel edge branch on the channel-summed signal ----
        sgn = jnp.sum(x, axis=0, keepdims=True)             # (1, HW)
        ex = jnp.zeros((1, HW), f32)
        ey = jnp.zeros((1, HW), f32)
        for ky in range(3):
            for kx in range(3):
                cx, cy = _SOBEL_X[ky][kx], _SOBEL_Y[ky][kx]
                if cx == 0.0 and cy == 0.0:
                    continue
                s = tap(sgn, ky - 1, kx - 1)
                if cx != 0.0:
                    ex = ex + cx * s
                if cy != 0.0:
                    ey = ey + cy * s

        # ---- concat [GC | sobel_x | sobel_y] along channels (sublane dim) ----
        yscr_ref[0:C, :] = out_gc
        yscr_ref[C:C + 1, :] = ex
        yscr_ref[C + 1:C + 2, :] = ey
        y = yscr_ref[...]                                   # (C2, HW)

        # ---- AttentionRefinment: 3x3 conv (zero pad, no bias) + BN + ReLU ----
        # Each tap is a lane-dense (C2_in, HW) operand; MXU N-dim = HW.
        acc = jnp.zeros((C2, HW), f32)
        for ky in range(3):
            for kx in range(3):
                acc = acc + jnp.dot(wc_ref[ky * 3 + kx],
                                    tap(y, ky - 1, kx - 1),
                                    preferred_element_type=f32)
        fm = jnp.maximum(acc * bn1s_ref[...] + bn1b_ref[...], 0.0)   # (C2, HW)

        # ---- channel attention: GAP -> 1x1 conv -> BN -> sigmoid ----
        gap = jnp.mean(fm, axis=1, keepdims=True)           # (C2, 1)
        z = jnp.dot(watt_ref[...], gap, preferred_element_type=f32)
        z = z * bn2s_ref[...] + bn2b_ref[...]
        se = jax.nn.sigmoid(z)                              # (C2, 1)

        out_ref[0] = fm * se + y                            # lane-dense store

    return kernel


def cefeb_forward(feature_nchw, params):
    """feature_nchw: (N, C, H, W) float32 -> (N, C+2, H, W) float32."""
    N, C, H, W = feature_nchw.shape
    C2 = C + 2
    HW = H * W
    (wm, bm, w1, b1, lng, lnb, w2, b2,
     wc_taps, bn1s, bn1b, watt, bn2s, bn2b) = params

    # Metadata-only host reshapes (no HBM data movement before/after the kernel).
    x = feature_nchw.astype(jnp.float32).reshape(N, C, HW)
    col_ids = (jnp.arange(HW, dtype=jnp.int32) % W).reshape(1, HW)

    weights = (wm, bm, w1, b1, lng, lnb, w2, b2,
               wc_taps, bn1s, bn1b, watt, bn2s, bn2b)

    def full(a):
        n = a.ndim
        return pl.BlockSpec(a.shape, lambda b, n=n: (0,) * n)

    grid_spec = pltpu.PrefetchScalarGridSpec(
        num_scalar_prefetch=0,
        grid=(N,),
        in_specs=[pl.BlockSpec((1, C, HW), lambda b: (b, 0, 0)),
                  full(col_ids)] + [full(wt) for wt in weights],
        out_specs=pl.BlockSpec((1, C2, HW), lambda b: (b, 0, 0)),
        scratch_shapes=[pltpu.VMEM((C2, HW), jnp.float32)],
    )

    out_flat = pl.pallas_call(
        _make_kernel(H, W, C),
        out_shape=jax.ShapeDtypeStruct((N, C2, HW), jnp.float32),
        grid_spec=grid_spec,
        compiler_params=pltpu.CompilerParams(
            dimension_semantics=("parallel",),
            vmem_limit_bytes=64 * 1024 * 1024),
    )(x, col_ids, *weights)

    return out_flat.reshape(N, C2, H, W)


def init_params(key, C):
    """Deterministic synthetic parameters (PyTorch init conventions for BN/LN)."""
    C2 = C + 2
    ks = jax.random.split(key, 8)
    s = 0.2
    wm = jax.random.normal(ks[0], (C, 1), jnp.float32) * s       # conv_mask (Cin -> 1)
    bm = jax.random.normal(ks[1], (1, 1), jnp.float32) * s
    w1 = jax.random.normal(ks[2], (C, C), jnp.float32) * s       # (out, in)
    b1 = jax.random.normal(ks[3], (C, 1), jnp.float32) * s
    lng = jnp.ones((C, 1), jnp.float32)
    lnb = jnp.zeros((C, 1), jnp.float32)
    w2 = jax.random.normal(ks[4], (C, C), jnp.float32) * s       # (out, in)
    b2 = jax.random.normal(ks[5], (C, 1), jnp.float32) * s
    wc = jax.random.normal(ks[6], (C2, C2, 3, 3), jnp.float32) * s   # OIHW, bias=False
    watt = jax.random.normal(ks[7], (C2, C2), jnp.float32) * s       # (out, in), bias=False

    # BatchNorm eval-mode fold (PyTorch default init stats).
    # TODO(synk): fold real trained running stats here for a trained model.
    g = jnp.ones((C2,), jnp.float32)
    beta = jnp.zeros((C2,), jnp.float32)
    rm = jnp.zeros((C2,), jnp.float32)
    rv = jnp.ones((C2,), jnp.float32)
    scale = g / jnp.sqrt(rv + _BN_EPS)
    shift = beta - rm * scale
    bn1s = scale.reshape(C2, 1)
    bn1b = shift.reshape(C2, 1)
    bn2s, bn2b = bn1s, bn1b

    wc_taps = jnp.transpose(wc, (2, 3, 0, 1)).reshape(9, C2, C2)   # [tap, out, in]
    return (wm, bm, w1, b1, lng, lnb, w2, b2,
            wc_taps, bn1s, bn1b, watt, bn2s, bn2b)


def cefeb_reference(feature, params):
    """Pure-JAX NCHW reference mirroring the PyTorch forward (validation)."""
    (wm, bm, w1, b1, lng, lnb, w2, b2,
     wc_taps, bn1s, bn1b, watt, bn2s, bn2b) = params
    hi = jax.lax.Precision.HIGHEST
    N, C, H, W = feature.shape
    C2 = C + 2
    x = feature.astype(jnp.float32)

    # GCNet context block
    xf = x.reshape(N, C, H * W)
    mask = jnp.einsum('c,ncl->nl', wm[:, 0], xf, precision=hi) + bm[0, 0]
    p = jax.nn.softmax(mask, axis=-1)
    ctx = jnp.einsum('ncl,nl->nc', xf, p, precision=hi)
    t = jnp.einsum('oc,nc->no', w1, ctx, precision=hi) + b1[:, 0][None]
    mu = jnp.mean(t, axis=-1, keepdims=True)
    var = jnp.mean((t - mu) ** 2, axis=-1, keepdims=True)
    t = (t - mu) / jnp.sqrt(var + _LN_EPS) * lng[:, 0][None] + lnb[:, 0][None]
    t = jnp.maximum(t, 0.0)
    t = jnp.einsum('oc,nc->no', w2, t, precision=hi) + b2[:, 0][None]
    out_gc = x + t[:, :, None, None]

    # Sobel branch
    xp = jnp.pad(x, ((0, 0), (0, 0), (1, 1), (1, 1)))
    sgn = jnp.sum(xp, axis=1)
    ex = jnp.zeros((N, H, W), jnp.float32)
    ey = jnp.zeros((N, H, W), jnp.float32)
    for ky in range(3):
        for kx in range(3):
            tp = sgn[:, ky:ky + H, kx:kx + W]
            ex = ex + _SOBEL_X[ky][kx] * tp
            ey = ey + _SOBEL_Y[ky][kx] * tp
    y = jnp.concatenate([out_gc, ex[:, None], ey[:, None]], axis=1)   # (N, C2, H, W)

    # AttentionRefinmentModule
    yp = jnp.pad(y, ((0, 0), (0, 0), (1, 1), (1, 1)))
    acc = jnp.zeros((N, C2, H, W), jnp.float32)
    for ky in range(3):
        for kx in range(3):
            tp = yp[:, :, ky:ky + H, kx:kx + W]
            acc = acc + jnp.einsum('oi,nihw->nohw', wc_taps[ky * 3 + kx], tp,
                                   precision=hi)
    fm = jnp.maximum(acc * bn1s[:, 0][None, :, None, None]
                     + bn1b[:, 0][None, :, None, None], 0.0)
    gap = jnp.mean(fm, axis=(2, 3))
    z = jnp.einsum('oi,ni->no', watt, gap, precision=hi) * bn2s[:, 0] + bn2b[:, 0]
    se = jax.nn.sigmoid(z)
    return fm * se[:, :, None, None] + y


if __name__ == "__main__":
    key = jax.random.PRNGKey(0)
    k_x, k_p = jax.random.split(key)
    N, C, H, W = 2, 4, 16, 16
    feature = jax.random.normal(k_x, (N, C, H, W), jnp.float32)
    params = init_params(k_p, C)

    out = cefeb_forward(feature, params)
    out = jax.block_until_ready(out)
    assert out.shape == (N, C + 2, H, W), out.shape

    ref = cefeb_reference(feature, params)
    max_err = float(jnp.max(jnp.abs(out - ref)))
    if max_err > 2e-2:
        raise AssertionError(f"kernel/reference mismatch: max_err={max_err}")

    print("KERNEL_OK")
</pallas_src>

<mosaic_0001>
module attributes {stable_mosaic.version = 11 : i64} {
  func.func @kernel(%arg0: i32, %arg1: memref<1x4x256xf32, #tpu.memory_space<vmem>>, %arg2: memref<1x256xi32, #tpu.memory_space<vmem>>, %arg3: memref<4x1xf32, #tpu.memory_space<vmem>>, %arg4: memref<1x1xf32, #tpu.memory_space<vmem>>, %arg5: memref<4x4xf32, #tpu.memory_space<vmem>>, %arg6: memref<4x1xf32, #tpu.memory_space<vmem>>, %arg7: memref<4x1xf32, #tpu.memory_space<vmem>>, %arg8: memref<4x1xf32, #tpu.memory_space<vmem>>, %arg9: memref<4x4xf32, #tpu.memory_space<vmem>>, %arg10: memref<4x1xf32, #tpu.memory_space<vmem>>, %arg11: memref<9x6x6xf32, #tpu.memory_space<vmem>>, %arg12: memref<6x1xf32, #tpu.memory_space<vmem>>, %arg13: memref<6x1xf32, #tpu.memory_space<vmem>>, %arg14: memref<6x6xf32, #tpu.memory_space<vmem>>, %arg15: memref<6x1xf32, #tpu.memory_space<vmem>>, %arg16: memref<6x1xf32, #tpu.memory_space<vmem>>, %arg17: memref<1x6x256xf32, #tpu.memory_space<vmem>>, %arg18: memref<6x256xf32, #tpu.memory_space<vmem>>) attributes {dimension_semantics = [#tpu.dimension_semantics<parallel>], iteration_bounds = array<i64: 2>, scalar_prefetch = 0 : i64, scratch_operands = 1 : i64, tpu.core_type = #tpu.core_type<tc>, window_params = [{transform_indices = @transform_0, window_bounds = array<i64: 1, 4, 256>}, {pipeline_mode = #tpu.pipeline_mode<synchronous>, transform_indices = @transform_1, window_bounds = array<i64: 1, 256>}, {pipeline_mode = #tpu.pipeline_mode<synchronous>, transform_indices = @transform_2, window_bounds = array<i64: 4, 1>}, {pipeline_mode = #tpu.pipeline_mode<synchronous>, transform_indices = @transform_3, window_bounds = array<i64: 1, 1>}, {pipeline_mode = #tpu.pipeline_mode<synchronous>, transform_indices = @transform_4, window_bounds = array<i64: 4, 4>}, {pipeline_mode = #tpu.pipeline_mode<synchronous>, transform_indices = @transform_5, window_bounds = array<i64: 4, 1>}, {pipeline_mode = #tpu.pipeline_mode<synchronous>, transform_indices = @transform_6, window_bounds = array<i64: 4, 1>}, {pipeline_mode = #tpu.pipeline_mode<synchronous>, transform_indices = @transform_7, window_bounds = array<i64: 4, 1>}, {pipeline_mode = #tpu.pipeline_mode<synchronous>, transform_indices = @transform_8, window_bounds = array<i64: 4, 4>}, {pipeline_mode = #tpu.pipeline_mode<synchronous>, transform_indices = @transform_9, window_bounds = array<i64: 4, 1>}, {pipeline_mode = #tpu.pipeline_mode<synchronous>, transform_indices = @transform_10, window_bounds = array<i64: 9, 6, 6>}, {pipeline_mode = #tpu.pipeline_mode<synchronous>, transform_indices = @transform_11, window_bounds = array<i64: 6, 1>}, {pipeline_mode = #tpu.pipeline_mode<synchronous>, transform_indices = @transform_12, window_bounds = array<i64: 6, 1>}, {pipeline_mode = #tpu.pipeline_mode<synchronous>, transform_indices = @transform_13, window_bounds = array<i64: 6, 6>}, {pipeline_mode = #tpu.pipeline_mode<synchronous>, transform_indices = @transform_14, window_bounds = array<i64: 6, 1>}, {pipeline_mode = #tpu.pipeline_mode<synchronous>, transform_indices = @transform_15, window_bounds = array<i64: 6, 1>}, {transform_indices = @transform_16, window_bounds = array<i64: 1, 6, 256>}]} {
    %c0 = arith.constant 0 : index
    %c0_0 = arith.constant 0 : index
    %c0_1 = arith.constant 0 : index
    %0 = vector.load %arg1[%c0, %c0_0, %c0_1] : memref<1x4x256xf32, #tpu.memory_space<vmem>>, vector<1x4x256xf32>
    %1 = vector.shape_cast %0 : vector<1x4x256xf32> to vector<4x256xf32>
    %c0_2 = arith.constant 0 : index
    %c0_3 = arith.constant 0 : index
    %2 = vector.load %arg2[%c0_2, %c0_3] : memref<1x256xi32, #tpu.memory_space<vmem>>, vector<1x256xi32>
    %3 = tpu.iota {dimensions = array<i32: 1>} : vector<1x256xi32>
    %c0_4 = arith.constant 0 : index
    %c0_5 = arith.constant 0 : index
    %4 = vector.load %arg3[%c0_4, %c0_5] : memref<4x1xf32, #tpu.memory_space<vmem>>, vector<4x1xf32>
    %5 = vector.broadcast %4 : vector<4x1xf32> to vector<4x256xf32>
    %6 = arith.mulf %1, %5 : vector<4x256xf32>
    %cst = arith.constant dense<0.000000e+00> : vector<256xf32>
    %7 = vector.multi_reduction <add>, %6, %cst [0] : vector<4x256xf32> to vector<256xf32>
    %8 = vector.shape_cast %7 : vector<256xf32> to vector<1x256xf32>
    %c0_6 = arith.constant 0 : index
    %c0_7 = arith.constant 0 : index
    %9 = vector.load %arg4[%c0_6, %c0_7] : memref<1x1xf32, #tpu.memory_space<vmem>>, vector<1x1xf32>
    %10 = vector.broadcast %9 : vector<1x1xf32> to vector<1x256xf32>
    %11 = arith.addf %8, %10 : vector<1x256xf32>
    %cst_8 = arith.constant dense<0xFF800000> : vector<1xf32>
    %12 = vector.multi_reduction <maximumf>, %11, %cst_8 [1] : vector<1x256xf32> to vector<1xf32>
    %13 = vector.shape_cast %12 : vector<1xf32> to vector<1x1xf32>
    %14 = vector.broadcast %13 : vector<1x1xf32> to vector<1x256xf32>
    %15 = arith.subf %11, %14 : vector<1x256xf32>
    %16 = math.exp %15 : vector<1x256xf32>
    %cst_9 = arith.constant dense<0.000000e+00> : vector<1xf32>
    %17 = vector.multi_reduction <add>, %16, %cst_9 [1] : vector<1x256xf32> to vector<1xf32>
    %18 = vector.shape_cast %17 : vector<1xf32> to vector<1x1xf32>
    %19 = vector.broadcast %18 : vector<1x1xf32> to vector<1x256xf32>
    %20 = arith.divf %16, %19 : vector<1x256xf32>
    %21 = vector.broadcast %20 : vector<1x256xf32> to vector<4x256xf32>
    %22 = arith.mulf %1, %21 : vector<4x256xf32>
    %cst_10 = arith.constant dense<0.000000e+00> : vector<4xf32>
    %23 = vector.multi_reduction <add>, %22, %cst_10 [1] : vector<4x256xf32> to vector<4xf32>
    %24 = vector.shape_cast %23 : vector<4xf32> to vector<4x1xf32>
    %c0_11 = arith.constant 0 : index
    %c0_12 = arith.constant 0 : index
    %25 = vector.load %arg5[%c0_11, %c0_12] : memref<4x4xf32, #tpu.memory_space<vmem>>, vector<4x4xf32>
    %cst_13 = arith.constant dense<0.000000e+00> : vector<4x1xf32>
    %26 = tpu.matmul %25, %24, %cst_13 {dimension_numbers = #tpu.dot_dimension_numbers<[1], [0], [0], [1], [0, 0, 1, 1], [], []>} : vector<4x4xf32>, vector<4x1xf32>, vector<4x1xf32> -> vector<4x1xf32>
    %c0_14 = arith.constant 0 : index
    %c0_15 = arith.constant 0 : index
    %27 = vector.load %arg6[%c0_14, %c0_15] : memref<4x1xf32, #tpu.memory_space<vmem>>, vector<4x1xf32>
    %28 = arith.addf %26, %27 : vector<4x1xf32>
    %cst_16 = arith.constant dense<0.000000e+00> : vector<1xf32>
    %29 = vector.multi_reduction <add>, %28, %cst_16 [0] : vector<4x1xf32> to vector<1xf32>
    %30 = vector.shape_cast %29 : vector<1xf32> to vector<1x1xf32>
    %cst_17 = arith.constant 4.000000e+00 : f32
    %31 = vector.broadcast %cst_17 : f32 to vector<1x1xf32>
    %32 = arith.divf %30, %31 : vector<1x1xf32>
    %33 = vector.broadcast %32 : vector<1x1xf32> to vector<4x1xf32>
    %34 = arith.subf %28, %33 : vector<4x1xf32>
    %35 = arith.mulf %34, %34 : vector<4x1xf32>
    %cst_18 = arith.constant dense<0.000000e+00> : vector<1xf32>
    %36 = vector.multi_reduction <add>, %35, %cst_18 [0] : vector<4x1xf32> to vector<1xf32>
    %37 = vector.shape_cast %36 : vector<1xf32> to vector<1x1xf32>
    %cst_19 = arith.constant 4.000000e+00 : f32
    %38 = vector.broadcast %cst_19 : f32 to vector<1x1xf32>
    %39 = arith.divf %37, %38 : vector<1x1xf32>
    %40 = vector.broadcast %32 : vector<1x1xf32> to vector<4x1xf32>
    %41 = arith.subf %28, %40 : vector<4x1xf32>
    %cst_20 = arith.constant 9.99999974E-6 : f32
    %42 = vector.broadcast %cst_20 : f32 to vector<1x1xf32>
    %43 = arith.addf %39, %42 : vector<1x1xf32>
    %44 = math.rsqrt %43 : vector<1x1xf32>
    %45 = vector.broadcast %44 : vector<1x1xf32> to vector<4x1xf32>
    %46 = arith.mulf %41, %45 : vector<4x1xf32>
    %c0_21 = arith.constant 0 : index
    %c0_22 = arith.constant 0 : index
    %47 = vector.load %arg7[%c0_21, %c0_22] : memref<4x1xf32, #tpu.memory_space<vmem>>, vector<4x1xf32>
    %48 = arith.mulf %46, %47 : vector<4x1xf32>
    %c0_23 = arith.constant 0 : index
    %c0_24 = arith.constant 0 : index
    %49 = vector.load %arg8[%c0_23, %c0_24] : memref<4x1xf32, #tpu.memory_space<vmem>>, vector<4x1xf32>
    %50 = arith.addf %48, %49 : vector<4x1xf32>
    %cst_25 = arith.constant 0.000000e+00 : f32
    %51 = vector.broadcast %cst_25 : f32 to vector<4x1xf32>
    %52 = arith.maximumf %50, %51 : vector<4x1xf32>
    %c0_26 = arith.constant 0 : index
    %c0_27 = arith.constant 0 : index
    %53 = vector.load %arg9[%c0_26, %c0_27] : memref<4x4xf32, #tpu.memory_space<vmem>>, vector<4x4xf32>
    %cst_28 = arith.constant dense<0.000000e+00> : vector<4x1xf32>
    %54 = tpu.matmul %53, %52, %cst_28 {dimension_numbers = #tpu.dot_dimension_numbers<[1], [0], [0], [1], [0, 0, 1, 1], [], []>} : vector<4x4xf32>, vector<4x1xf32>, vector<4x1xf32> -> vector<4x1xf32>
    %c0_29 = arith.constant 0 : index
    %c0_30 = arith.constant 0 : index
    %55 = vector.load %arg10[%c0_29, %c0_30] : memref<4x1xf32, #tpu.memory_space<vmem>>, vector<4x1xf32>
    %56 = arith.addf %54, %55 : vector<4x1xf32>
    %57 = vector.broadcast %56 : vector<4x1xf32> to vector<4x256xf32>
    %58 = arith.addf %1, %57 : vector<4x256xf32>
    %cst_31 = arith.constant dense<0.000000e+00> : vector<256xf32>
    %59 = vector.multi_reduction <add>, %1, %cst_31 [0] : vector<4x256xf32> to vector<256xf32>
    %60 = vector.shape_cast %59 : vector<256xf32> to vector<1x256xf32>
    %cst_32 = arith.constant 0.000000e+00 : f32
    %61 = vector.broadcast %cst_32 : f32 to vector<1x256xf32>
    %cst_33 = arith.constant 0.000000e+00 : f32
    %62 = vector.broadcast %cst_33 : f32 to vector<1x256xf32>
    %c17_i32 = arith.constant 17 : i32
    %63 = tpu.dynamic_rotate %60 by %c17_i32 dim 1 : vector<1x256xf32>, i32 -> vector<1x256xf32>
    %c1_i32 = arith.constant 1 : i32
    %64 = vector.broadcast %c1_i32 : i32 to vector<1x256xi32>
    %65 = arith.cmpi sge, %2, %64 : vector<1x256xi32>
    %c16_i32 = arith.constant 16 : i32
    %66 = vector.broadcast %c16_i32 : i32 to vector<1x256xi32>
    %67 = arith.cmpi sge, %3, %66 : vector<1x256xi32>
    %68 = arith.andi %65, %67 : vector<1x256xi1>
    %cst_34 = arith.constant 0.000000e+00 : f32
    %69 = vector.broadcast %cst_34 : f32 to vector<1x256xf32>
    %70 = arith.select %68, %63, %69 : vector<1x256xi1>, vector<1x256xf32>
    %cst_35 = arith.constant -1.000000e+00 : f32
    %71 = vector.broadcast %cst_35 : f32 to vector<1x256xf32>
    %72 = arith.mulf %71, %70 : vector<1x256xf32>
    %73 = arith.addf %61, %72 : vector<1x256xf32>
    %cst_36 = arith.constant -1.000000e+00 : f32
    %74 = vector.broadcast %cst_36 : f32 to vector<1x256xf32>
    %75 = arith.mulf %74, %70 : vector<1x256xf32>
    %76 = arith.addf %62, %75 : vector<1x256xf32>
    %c16_i32_37 = arith.constant 16 : i32
    %77 = tpu.dynamic_rotate %60 by %c16_i32_37 dim 1 : vector<1x256xf32>, i32 -> vector<1x256xf32>
    %c16_i32_38 = arith.constant 16 : i32
    %78 = vector.broadcast %c16_i32_38 : i32 to vector<1x256xi32>
    %79 = arith.cmpi sge, %3, %78 : vector<1x256xi32>
    %cst_39 = arith.constant 0.000000e+00 : f32
    %80 = vector.broadcast %cst_39 : f32 to vector<1x256xf32>
    %81 = arith.select %79, %77, %80 : vector<1x256xi1>, vector<1x256xf32>
    %cst_40 = arith.constant -2.000000e+00 : f32
    %82 = vector.broadcast %cst_40 : f32 to vector<1x256xf32>
    %83 = arith.mulf %82, %81 : vector<1x256xf32>
    %84 = arith.addf %76, %83 : vector<1x256xf32>
    %c15_i32 = arith.constant 15 : i32
    %85 = tpu.dynamic_rotate %60 by %c15_i32 dim 1 : vector<1x256xf32>, i32 -> vector<1x256xf32>
    %c15_i32_41 = arith.constant 15 : i32
    %86 = vector.broadcast %c15_i32_41 : i32 to vector<1x256xi32>
    %87 = arith.cmpi slt, %2, %86 : vector<1x256xi32>
    %c16_i32_42 = arith.constant 16 : i32
    %88 = vector.broadcast %c16_i32_42 : i32 to vector<1x256xi32>
    %89 = arith.cmpi sge, %3, %88 : vector<1x256xi32>
    %90 = arith.andi %87, %89 : vector<1x256xi1>
    %cst_43 = arith.constant 0.000000e+00 : f32
    %91 = vector.broadcast %cst_43 : f32 to vector<1x256xf32>
    %92 = arith.select %90, %85, %91 : vector<1x256xi1>, vector<1x256xf32>
    %cst_44 = arith.constant 1.000000e+00 : f32
    %93 = vector.broadcast %cst_44 : f32 to vector<1x256xf32>
    %94 = arith.mulf %93, %92 : vector<1x256xf32>
    %95 = arith.addf %73, %94 : vector<1x256xf32>
    %cst_45 = arith.constant -1.000000e+00 : f32
    %96 = vector.broadcast %cst_45 : f32 to vector<1x256xf32>
    %97 = arith.mulf %96, %92 : vector<1x256xf32>
    %98 = arith.addf %84, %97 : vector<1x256xf32>
    %c1_i32_46 = arith.constant 1 : i32
    %99 = tpu.dynamic_rotate %60 by %c1_i32_46 dim 1 : vector<1x256xf32>, i32 -> vector<1x256xf32>
    %c1_i32_47 = arith.constant 1 : i32
    %100 = vector.broadcast %c1_i32_47 : i32 to vector<1x256xi32>
    %101 = arith.cmpi sge, %2, %100 : vector<1x256xi32>
    %cst_48 = arith.constant 0.000000e+00 : f32
    %102 = vector.broadcast %cst_48 : f32 to vector<1x256xf32>
    %103 = arith.select %101, %99, %102 : vector<1x256xi1>, vector<1x256xf32>
    %cst_49 = arith.constant -2.000000e+00 : f32
    %104 = vector.broadcast %cst_49 : f32 to vector<1x256xf32>
    %105 = arith.mulf %104, %103 : vector<1x256xf32>
    %106 = arith.addf %95, %105 : vector<1x256xf32>
    %c255_i32 = arith.constant 255 : i32
    %107 = tpu.dynamic_rotate %60 by %c255_i32 dim 1 : vector<1x256xf32>, i32 -> vector<1x256xf32>
    %c15_i32_50 = arith.constant 15 : i32
    %108 = vector.broadcast %c15_i32_50 : i32 to vector<1x256xi32>
    %109 = arith.cmpi slt, %2, %108 : vector<1x256xi32>
    %cst_51 = arith.constant 0.000000e+00 : f32
    %110 = vector.broadcast %cst_51 : f32 to vector<1x256xf32>
    %111 = arith.select %109, %107, %110 : vector<1x256xi1>, vector<1x256xf32>
    %cst_52 = arith.constant 2.000000e+00 : f32
    %112 = vector.broadcast %cst_52 : f32 to vector<1x256xf32>
    %113 = arith.mulf %112, %111 : vector<1x256xf32>
    %114 = arith.addf %106, %113 : vector<1x256xf32>
    %c241_i32 = arith.constant 241 : i32
    %115 = tpu.dynamic_rotate %60 by %c241_i32 dim 1 : vector<1x256xf32>, i32 -> vector<1x256xf32>
    %c1_i32_53 = arith.constant 1 : i32
    %116 = vector.broadcast %c1_i32_53 : i32 to vector<1x256xi32>
    %117 = arith.cmpi sge, %2, %116 : vector<1x256xi32>
    %c240_i32 = arith.constant 240 : i32
    %118 = vector.broadcast %c240_i32 : i32 to vector<1x256xi32>
    %119 = arith.cmpi slt, %3, %118 : vector<1x256xi32>
    %120 = arith.andi %117, %119 : vector<1x256xi1>
    %cst_54 = arith.constant 0.000000e+00 : f32
    %121 = vector.broadcast %cst_54 : f32 to vector<1x256xf32>
    %122 = arith.select %120, %115, %121 : vector<1x256xi1>, vector<1x256xf32>
    %cst_55 = arith.constant -1.000000e+00 : f32
    %123 = vector.broadcast %cst_55 : f32 to vector<1x256xf32>
    %124 = arith.mulf %123, %122 : vector<1x256xf32>
    %125 = arith.addf %114, %124 : vector<1x256xf32>
    %cst_56 = arith.constant 1.000000e+00 : f32
    %126 = vector.broadcast %cst_56 : f32 to vector<1x256xf32>
    %127 = arith.mulf %126, %122 : vector<1x256xf32>
    %128 = arith.addf %98, %127 : vector<1x256xf32>
    %c240_i32_57 = arith.constant 240 : i32
    %129 = tpu.dynamic_rotate %60 by %c240_i32_57 dim 1 : vector<1x256xf32>, i32 -> vector<1x256xf32>
    %c240_i32_58 = arith.constant 240 : i32
    %130 = vector.broadcast %c240_i32_58 : i32 to vector<1x256xi32>
    %131 = arith.cmpi slt, %3, %130 : vector<1x256xi32>
    %cst_59 = arith.constant 0.000000e+00 : f32
    %132 = vector.broadcast %cst_59 : f32 to vector<1x256xf32>
    %133 = arith.select %131, %129, %132 : vector<1x256xi1>, vector<1x256xf32>
    %cst_60 = arith.constant 2.000000e+00 : f32
    %134 = vector.broadcast %cst_60 : f32 to vector<1x256xf32>
    %135 = arith.mulf %134, %133 : vector<1x256xf32>
    %136 = arith.addf %128, %135 : vector<1x256xf32>
    %c239_i32 = arith.constant 239 : i32
    %137 = tpu.dynamic_rotate %60 by %c239_i32 dim 1 : vector<1x256xf32>, i32 -> vector<1x256xf32>
    %c15_i32_61 = arith.constant 15 : i32
    %138 = vector.broadcast %c15_i32_61 : i32 to vector<1x256xi32>
    %139 = arith.cmpi slt, %2, %138 : vector<1x256xi32>
    %c240_i32_62 = arith.constant 240 : i32
    %140 = vector.broadcast %c240_i32_62 : i32 to vector<1x256xi32>
    %141 = arith.cmpi slt, %3, %140 : vector<1x256xi32>
    %142 = arith.andi %139, %141 : vector<1x256xi1>
    %cst_63 = arith.constant 0.000000e+00 : f32
    %143 = vector.broadcast %cst_63 : f32 to vector<1x256xf32>
    %144 = arith.select %142, %137, %143 : vector<1x256xi1>, vector<1x256xf32>
    %cst_64 = arith.constant 1.000000e+00 : f32
    %145 = vector.broadcast %cst_64 : f32 to vector<1x256xf32>
    %146 = arith.mulf %145, %144 : vector<1x256xf32>
    %147 = arith.addf %125, %146 : vector<1x256xf32>
    %cst_65 = arith.constant 1.000000e+00 : f32
    %148 = vector.broadcast %cst_65 : f32 to vector<1x256xf32>
    %149 = arith.mulf %148, %144 : vector<1x256xf32>
    %150 = arith.addf %136, %149 : vector<1x256xf32>
    %c0_66 = arith.constant 0 : index
    %c0_67 = arith.constant 0 : index
    %151 = vector.load %arg18[%c0_66, %c0_67] : memref<6x256xf32, #tpu.memory_space<vmem>>, vector<4x256xf32>
    tpu.vector_store %arg18[%c0_66, %c0_67], %58 {strides = array<i32>} : memref<6x256xf32, #tpu.memory_space<vmem>>, vector<4x256xf32>,
    %c4 = arith.constant 4 : index
    %c0_68 = arith.constant 0 : index
    %152 = vector.load %arg18[%c4, %c0_68] : memref<6x256xf32, #tpu.memory_space<vmem>>, vector<1x256xf32>
    tpu.vector_store %arg18[%c4, %c0_68], %147 {strides = array<i32>} : memref<6x256xf32, #tpu.memory_space<vmem>>, vector<1x256xf32>,
    %c5 = arith.constant 5 : index
    %c0_69 = arith.constant 0 : index
    %153 = vector.load %arg18[%c5, %c0_69] : memref<6x256xf32, #tpu.memory_space<vmem>>, vector<1x256xf32>
    tpu.vector_store %arg18[%c5, %c0_69], %150 {strides = array<i32>} : memref<6x256xf32, #tpu.memory_space<vmem>>, vector<1x256xf32>,
    %c0_70 = arith.constant 0 : index
    %c0_71 = arith.constant 0 : index
    %154 = vector.load %arg18[%c0_70, %c0_71] : memref<6x256xf32, #tpu.memory_space<vmem>>, vector<6x256xf32>
    %cst_72 = arith.constant 0.000000e+00 : f32
    %155 = vector.broadcast %cst_72 : f32 to vector<6x256xf32>
    %c0_73 = arith.constant 0 : index
    %c0_74 = arith.constant 0 : index
    %c0_75 = arith.constant 0 : index
    %156 = vector.load %arg11[%c0_73, %c0_74, %c0_75] : memref<9x6x6xf32, #tpu.memory_space<vmem>>, vector<1x6x6xf32>
    %157 = vector.shape_cast %156 : vector<1x6x6xf32> to vector<6x6xf32>
    %c17_i32_76 = arith.constant 17 : i32
    %158 = tpu.dynamic_rotate %154 by %c17_i32_76 dim 1 : vector<6x256xf32>, i32 -> vector<6x256xf32>
    %c1_i32_77 = arith.constant 1 : i32
    %159 = vector.broadcast %c1_i32_77 : i32 to vector<1x256xi32>
    %160 = arith.cmpi sge, %2, %159 : vector<1x256xi32>
    %c16_i32_78 = arith.constant 16 : i32
    %161 = vector.broadcast %c16_i32_78 : i32 to vector<1x256xi32>
    %162 = arith.cmpi sge, %3, %161 : vector<1x256xi32>
    %163 = arith.andi %160, %162 : vector<1x256xi1>
    %cst_79 = arith.constant 0.000000e+00 : f32
    %164 = vector.shape_cast %163 : vector<1x256xi1> to vector<1x256xi1>
    %165 = vector.broadcast %164 : vector<1x256xi1> to vector<6x256xi1>
    %166 = vector.broadcast %cst_79 : f32 to vector<6x256xf32>
    %167 = arith.select %165, %158, %166 : vector<6x256xi1>, vector<6x256xf32>
    %cst_80 = arith.constant dense<0.000000e+00> : vector<6x256xf32>
    %168 = tpu.matmul %157, %167, %cst_80 {dimension_numbers = #tpu.dot_dimension_numbers<[1], [0], [0], [1], [0, 0, 1, 1], [], []>} : vector<6x6xf32>, vector<6x256xf32>, vector<6x256xf32> -> vector<6x256xf32>
    %169 = arith.addf %155, %168 : vector<6x256xf32>
    %c1 = arith.constant 1 : index
    %c0_81 = arith.constant 0 : index
    %c0_82 = arith.constant 0 : index
    %170 = vector.load %arg11[%c1, %c0_81, %c0_82] : memref<9x6x6xf32, #tpu.memory_space<vmem>>, vector<1x6x6xf32>
    %171 = vector.shape_cast %170 : vector<1x6x6xf32> to vector<6x6xf32>
    %c16_i32_83 = arith.constant 16 : i32
    %172 = tpu.dynamic_rotate %154 by %c16_i32_83 dim 1 : vector<6x256xf32>, i32 -> vector<6x256xf32>
    %c16_i32_84 = arith.constant 16 : i32
    %173 = vector.broadcast %c16_i32_84 : i32 to vector<1x256xi32>
    %174 = arith.cmpi sge, %3, %173 : vector<1x256xi32>
    %cst_85 = arith.constant 0.000000e+00 : f32
    %175 = vector.shape_cast %174 : vector<1x256xi1> to vector<1x256xi1>
    %176 = vector.broadcast %175 : vector<1x256xi1> to vector<6x256xi1>
    %177 = vector.broadcast %cst_85 : f32 to vector<6x256xf32>
    %178 = arith.select %176, %172, %177 : vector<6x256xi1>, vector<6x256xf32>
    %cst_86 = arith.constant dense<0.000000e+00> : vector<6x256xf32>
    %179 = tpu.matmul %171, %178, %cst_86 {dimension_numbers = #tpu.dot_dimension_numbers<[1], [0], [0], [1], [0, 0, 1, 1], [], []>} : vector<6x6xf32>, vector<6x256xf32>, vector<6x256xf32> -> vector<6x256xf32>
    %180 = arith.addf %169, %179 : vector<6x256xf32>
    %c2 = arith.constant 2 : index
    %c0_87 = arith.constant 0 : index
    %c0_88 = arith.constant 0 : index
    %181 = vector.load %arg11[%c2, %c0_87, %c0_88] : memref<9x6x6xf32, #tpu.memory_space<vmem>>, vector<1x6x6xf32>
    %182 = vector.shape_cast %181 : vector<1x6x6xf32> to vector<6x6xf32>
    %c15_i32_89 = arith.constant 15 : i32
    %183 = tpu.dynamic_rotate %154 by %c15_i32_89 dim 1 : vector<6x256xf32>, i32 -> vector<6x256xf32>
    %c15_i32_90 = arith.constant 15 : i32
    %184 = vector.broadcast %c15_i32_90 : i32 to vector<1x256xi32>
    %185 = arith.cmpi slt, %2, %184 : vector<1x256xi32>
    %c16_i32_91 = arith.constant 16 : i32
    %186 = vector.broadcast %c16_i32_91 : i32 to vector<1x256xi32>
    %187 = arith.cmpi sge, %3, %186 : vector<1x256xi32>
    %188 = arith.andi %185, %187 : vector<1x256xi1>
    %cst_92 = arith.constant 0.000000e+00 : f32
    %189 = vector.shape_cast %188 : vector<1x256xi1> to vector<1x256xi1>
    %190 = vector.broadcast %189 : vector<1x256xi1> to vector<6x256xi1>
    %191 = vector.broadcast %cst_92 : f32 to vector<6x256xf32>
    %192 = arith.select %190, %183, %191 : vector<6x256xi1>, vector<6x256xf32>
    %cst_93 = arith.constant dense<0.000000e+00> : vector<6x256xf32>
    %193 = tpu.matmul %182, %192, %cst_93 {dimension_numbers = #tpu.dot_dimension_numbers<[1], [0], [0], [1], [0, 0, 1, 1], [], []>} : vector<6x6xf32>, vector<6x256xf32>, vector<6x256xf32> -> vector<6x256xf32>
    %194 = arith.addf %180, %193 : vector<6x256xf32>
    %c3 = arith.constant 3 : index
    %c0_94 = arith.constant 0 : index
    %c0_95 = arith.constant 0 : index
    %195 = vector.load %arg11[%c3, %c0_94, %c0_95] : memref<9x6x6xf32, #tpu.memory_space<vmem>>, vector<1x6x6xf32>
    %196 = vector.shape_cast %195 : vector<1x6x6xf32> to vector<6x6xf32>
    %c1_i32_96 = arith.constant 1 : i32
    %197 = tpu.dynamic_rotate %154 by %c1_i32_96 dim 1 : vector<6x256xf32>, i32 -> vector<6x256xf32>
    %c1_i32_97 = arith.constant 1 : i32
    %198 = vector.broadcast %c1_i32_97 : i32 to vector<1x256xi32>
    %199 = arith.cmpi sge, %2, %198 : vector<1x256xi32>
    %cst_98 = arith.constant 0.000000e+00 : f32
    %200 = vector.shape_cast %199 : vector<1x256xi1> to vector<1x256xi1>
    %201 = vector.broadcast %200 : vector<1x256xi1> to vector<6x256xi1>
    %202 = vector.broadcast %cst_98 : f32 to vector<6x256xf32>
    %203 = arith.select %201, %197, %202 : vector<6x256xi1>, vector<6x256xf32>
    %cst_99 = arith.constant dense<0.000000e+00> : vector<6x256xf32>
    %204 = tpu.matmul %196, %203, %cst_99 {dimension_numbers = #tpu.dot_dimension_numbers<[1], [0], [0], [1], [0, 0, 1, 1], [], []>} : vector<6x6xf32>, vector<6x256xf32>, vector<6x256xf32> -> vector<6x256xf32>
    %205 = arith.addf %194, %204 : vector<6x256xf32>
    %c4_100 = arith.constant 4 : index
    %c0_101 = arith.constant 0 : index
    %c0_102 = arith.constant 0 : index
    %206 = vector.load %arg11[%c4_100, %c0_101, %c0_102] : memref<9x6x6xf32, #tpu.memory_space<vmem>>, vector<1x6x6xf32>
    %207 = vector.shape_cast %206 : vector<1x6x6xf32> to vector<6x6xf32>
    %cst_103 = arith.constant dense<0.000000e+00> : vector<6x256xf32>
    %208 = tpu.matmul %207, %154, %cst_103 {dimension_numbers = #tpu.dot_dimension_numbers<[1], [0], [0], [1], [0, 0, 1, 1], [], []>} : vector<6x6xf32>, vector<6x256xf32>, vector<6x256xf32> -> vector<6x256xf32>
    %209 = arith.addf %205, %208 : vector<6x256xf32>
    %c5_104 = arith.constant 5 : index
    %c0_105 = arith.constant 0 : index
    %c0_106 = arith.constant 0 : index
    %210 = vector.load %arg11[%c5_104, %c0_105, %c0_106] : memref<9x6x6xf32, #tpu.memory_space<vmem>>, vector<1x6x6xf32>
    %211 = vector.shape_cast %210 : vector<1x6x6xf32> to vector<6x6xf32>
    %c255_i32_107 = arith.constant 255 : i32
    %212 = tpu.dynamic_rotate %154 by %c255_i32_107 dim 1 : vector<6x256xf32>, i32 -> vector<6x256xf32>
    %c15_i32_108 = arith.constant 15 : i32
    %213 = vector.broadcast %c15_i32_108 : i32 to vector<1x256xi32>
    %214 = arith.cmpi slt, %2, %213 : vector<1x256xi32>
    %cst_109 = arith.constant 0.000000e+00 : f32
    %215 = vector.shape_cast %214 : vector<1x256xi1> to vector<1x256xi1>
    %216 = vector.broadcast %215 : vector<1x256xi1> to vector<6x256xi1>
    %217 = vector.broadcast %cst_109 : f32 to vector<6x256xf32>
    %218 = arith.select %216, %212, %217 : vector<6x256xi1>, vector<6x256xf32>
    %cst_110 = arith.constant dense<0.000000e+00> : vector<6x256xf32>
    %219 = tpu.matmul %211, %218, %cst_110 {dimension_numbers = #tpu.dot_dimension_numbers<[1], [0], [0], [1], [0, 0, 1, 1], [], []>} : vector<6x6xf32>, vector<6x256xf32>, vector<6x256xf32> -> vector<6x256xf32>
    %220 = arith.addf %209, %219 : vector<6x256xf32>
    %c6 = arith.constant 6 : index
    %c0_111 = arith.constant 0 : index
    %c0_112 = arith.constant 0 : index
    %221 = vector.load %arg11[%c6, %c0_111, %c0_112] : memref<9x6x6xf32, #tpu.memory_space<vmem>>, vector<1x6x6xf32>
    %222 = vector.shape_cast %221 : vector<1x6x6xf32> to vector<6x6xf32>
    %c241_i32_113 = arith.constant 241 : i32
    %223 = tpu.dynamic_rotate %154 by %c241_i32_113 dim 1 : vector<6x256xf32>, i32 -> vector<6x256xf32>
    %c1_i32_114 = arith.constant 1 : i32
    %224 = vector.broadcast %c1_i32_114 : i32 to vector<1x256xi32>
    %225 = arith.cmpi sge, %2, %224 : vector<1x256xi32>
    %c240_i32_115 = arith.constant 240 : i32
    %226 = vector.broadcast %c240_i32_115 : i32 to vector<1x256xi32>
    %227 = arith.cmpi slt, %3, %226 : vector<1x256xi32>
    %228 = arith.andi %225, %227 : vector<1x256xi1>
    %cst_116 = arith.constant 0.000000e+00 : f32
    %229 = vector.shape_cast %228 : vector<1x256xi1> to vector<1x256xi1>
    %230 = vector.broadcast %229 : vector<1x256xi1> to vector<6x256xi1>
    %231 = vector.broadcast %cst_116 : f32 to vector<6x256xf32>
    %232 = arith.select %230, %223, %231 : vector<6x256xi1>, vector<6x256xf32>
    %cst_117 = arith.constant dense<0.000000e+00> : vector<6x256xf32>
    %233 = tpu.matmul %222, %232, %cst_117 {dimension_numbers = #tpu.dot_dimension_numbers<[1], [0], [0], [1], [0, 0, 1, 1], [], []>} : vector<6x6xf32>, vector<6x256xf32>, vector<6x256xf32> -> vector<6x256xf32>
    %234 = arith.addf %220, %233 : vector<6x256xf32>
    %c7 = arith.constant 7 : index
    %c0_118 = arith.constant 0 : index
    %c0_119 = arith.constant 0 : index
    %235 = vector.load %arg11[%c7, %c0_118, %c0_119] : memref<9x6x6xf32, #tpu.memory_space<vmem>>, vector<1x6x6xf32>
    %236 = vector.shape_cast %235 : vector<1x6x6xf32> to vector<6x6xf32>
    %c240_i32_120 = arith.constant 240 : i32
    %237 = tpu.dynamic_rotate %154 by %c240_i32_120 dim 1 : vector<6x256xf32>, i32 -> vector<6x256xf32>
    %c240_i32_121 = arith.constant 240 : i32
    %238 = vector.broadcast %c240_i32_121 : i32 to vector<1x256xi32>
    %239 = arith.cmpi slt, %3, %238 : vector<1x256xi32>
    %cst_122 = arith.constant 0.000000e+00 : f32
    %240 = vector.shape_cast %239 : vector<1x256xi1> to vector<1x256xi1>
    %241 = vector.broadcast %240 : vector<1x256xi1> to vector<6x256xi1>
    %242 = vector.broadcast %cst_122 : f32 to vector<6x256xf32>
    %243 = arith.select %241, %237, %242 : vector<6x256xi1>, vector<6x256xf32>
    %cst_123 = arith.constant dense<0.000000e+00> : vector<6x256xf32>
    %244 = tpu.matmul %236, %243, %cst_123 {dimension_numbers = #tpu.dot_dimension_numbers<[1], [0], [0], [1], [0, 0, 1, 1], [], []>} : vector<6x6xf32>, vector<6x256xf32>, vector<6x256xf32> -> vector<6x256xf32>
    %245 = arith.addf %234, %244 : vector<6x256xf32>
    %c8 = arith.constant 8 : index
    %c0_124 = arith.constant 0 : index
    %c0_125 = arith.constant 0 : index
    %246 = vector.load %arg11[%c8, %c0_124, %c0_125] : memref<9x6x6xf32, #tpu.memory_space<vmem>>, vector<1x6x6xf32>
    %247 = vector.shape_cast %246 : vector<1x6x6xf32> to vector<6x6xf32>
    %c239_i32_126 = arith.constant 239 : i32
    %248 = tpu.dynamic_rotate %154 by %c239_i32_126 dim 1 : vector<6x256xf32>, i32 -> vector<6x256xf32>
    %c15_i32_127 = arith.constant 15 : i32
    %249 = vector.broadcast %c15_i32_127 : i32 to vector<1x256xi32>
    %250 = arith.cmpi slt, %2, %249 : vector<1x256xi32>
    %c240_i32_128 = arith.constant 240 : i32
    %251 = vector.broadcast %c240_i32_128 : i32 to vector<1x256xi32>
    %252 = arith.cmpi slt, %3, %251 : vector<1x256xi32>
    %253 = arith.andi %250, %252 : vector<1x256xi1>
    %cst_129 = arith.constant 0.000000e+00 : f32
    %254 = vector.shape_cast %253 : vector<1x256xi1> to vector<1x256xi1>
    %255 = vector.broadcast %254 : vector<1x256xi1> to vector<6x256xi1>
    %256 = vector.broadcast %cst_129 : f32 to vector<6x256xf32>
    %257 = arith.select %255, %248, %256 : vector<6x256xi1>, vector<6x256xf32>
    %cst_130 = arith.constant dense<0.000000e+00> : vector<6x256xf32>
    %258 = tpu.matmul %247, %257, %cst_130 {dimension_numbers = #tpu.dot_dimension_numbers<[1], [0], [0], [1], [0, 0, 1, 1], [], []>} : vector<6x6xf32>, vector<6x256xf32>, vector<6x256xf32> -> vector<6x256xf32>
    %259 = arith.addf %245, %258 : vector<6x256xf32>
    %c0_131 = arith.constant 0 : index
    %c0_132 = arith.constant 0 : index
    %260 = vector.load %arg12[%c0_131, %c0_132] : memref<6x1xf32, #tpu.memory_space<vmem>>, vector<6x1xf32>
    %261 = vector.broadcast %260 : vector<6x1xf32> to vector<6x256xf32>
    %262 = arith.mulf %259, %261 : vector<6x256xf32>
    %c0_133 = arith.constant 0 : index
    %c0_134 = arith.constant 0 : index
    %263 = vector.load %arg13[%c0_133, %c0_134] : memref<6x1xf32, #tpu.memory_space<vmem>>, vector<6x1xf32>
    %264 = vector.broadcast %263 : vector<6x1xf32> to vector<6x256xf32>
    %265 = arith.addf %262, %264 : vector<6x256xf32>
    %cst_135 = arith.constant 0.000000e+00 : f32
    %266 = vector.broadcast %cst_135 : f32 to vector<6x256xf32>
    %267 = arith.maximumf %265, %266 : vector<6x256xf32>
    %cst_136 = arith.constant dense<0.000000e+00> : vector<6xf32>
    %268 = vector.multi_reduction <add>, %267, %cst_136 [1] : vector<6x256xf32> to vector<6xf32>
    %269 = vector.shape_cast %268 : vector<6xf32> to vector<6x1xf32>
    %cst_137 = arith.constant 2.560000e+02 : f32
    %270 = vector.broadcast %cst_137 : f32 to vector<6x1xf32>
    %271 = arith.divf %269, %270 : vector<6x1xf32>
    %c0_138 = arith.constant 0 : index
    %c0_139 = arith.constant 0 : index
    %272 = vector.load %arg14[%c0_138, %c0_139] : memref<6x6xf32, #tpu.memory_space<vmem>>, vector<6x6xf32>
    %cst_140 = arith.constant dense<0.000000e+00> : vector<6x1xf32>
    %273 = tpu.matmul %272, %271, %cst_140 {dimension_numbers = #tpu.dot_dimension_numbers<[1], [0], [0], [1], [0, 0, 1, 1], [], []>} : vector<6x6xf32>, vector<6x1xf32>, vector<6x1xf32> -> vector<6x1xf32>
    %c0_141 = arith.constant 0 : index
    %c0_142 = arith.constant 0 : index
    %274 = vector.load %arg15[%c0_141, %c0_142] : memref<6x1xf32, #tpu.memory_space<vmem>>, vector<6x1xf32>
    %275 = arith.mulf %273, %274 : vector<6x1xf32>
    %c0_143 = arith.constant 0 : index
    %c0_144 = arith.constant 0 : index
    %276 = vector.load %arg16[%c0_143, %c0_144] : memref<6x1xf32, #tpu.memory_space<vmem>>, vector<6x1xf32>
    %277 = arith.addf %275, %276 : vector<6x1xf32>
    %278 = arith.negf %277 : vector<6x1xf32>
    %279 = math.exp %278 : vector<6x1xf32>
    %cst_145 = arith.constant 1.000000e+00 : f32
    %280 = vector.broadcast %cst_145 : f32 to vector<6x1xf32>
    %281 = arith.addf %280, %279 : vector<6x1xf32>
    %282 = arith.divf %280, %281 : vector<6x1xf32>
    %283 = vector.broadcast %282 : vector<6x1xf32> to vector<6x256xf32>
    %284 = arith.mulf %267, %283 : vector<6x256xf32>
    %285 = arith.addf %284, %154 : vector<6x256xf32>
    %c0_146 = arith.constant 0 : index
    %c0_147 = arith.constant 0 : index
    %c0_148 = arith.constant 0 : index
    %286 = vector.load %arg17[%c0_146, %c0_147, %c0_148] : memref<1x6x256xf32, #tpu.memory_space<vmem>>, vector<1x6x256xf32>
    %287 = vector.shape_cast %286 : vector<1x6x256xf32> to vector<6x256xf32>
    %288 = vector.shape_cast %285 : vector<6x256xf32> to vector<1x6x256xf32>
    tpu.vector_store %arg17[%c0_146, %c0_147, %c0_148], %288 {strides = array<i32>} : memref<1x6x256xf32, #tpu.memory_space<vmem>>, vector<1x6x256xf32>,
    return
  }
  func.func @transform_0(%arg0: i32) -> (i32, i32, i32) {
    %c0_i32 = arith.constant 0 : i32
    %c0_i32_0 = arith.constant 0 : i32
    %c0_i32_1 = arith.constant 0 : i32
    return %arg0, %c0_i32, %c0_i32_0 : i32, i32, i32
  }
  func.func @transform_1(%arg0: i32) -> (i32, i32) {
    %c0_i32 = arith.constant 0 : i32
    %c0_i32_0 = arith.constant 0 : i32
    %c0_i32_1 = arith.constant 0 : i32
    return %c0_i32, %c0_i32_0 : i32, i32
  }
  func.func @transform_2(%arg0: i32) -> (i32, i32) {
    %c0_i32 = arith.constant 0 : i32
    %c0_i32_0 = arith.constant 0 : i32
    %c0_i32_1 = arith.constant 0 : i32
    return %c0_i32, %c0_i32_0 : i32, i32
  }
  func.func @transform_3(%arg0: i32) -> (i32, i32) {
    %c0_i32 = arith.constant 0 : i32
    %c0_i32_0 = arith.constant 0 : i32
    %c0_i32_1 = arith.constant 0 : i32
    return %c0_i32, %c0_i32_0 : i32, i32
  }
  func.func @transform_4(%arg0: i32) -> (i32, i32) {
    %c0_i32 = arith.constant 0 : i32
    %c0_i32_0 = arith.constant 0 : i32
    %c0_i32_1 = arith.constant 0 : i32
    return %c0_i32, %c0_i32_0 : i32, i32
  }
  func.func @transform_5(%arg0: i32) -> (i32, i32) {
    %c0_i32 = arith.constant 0 : i32
    %c0_i32_0 = arith.constant 0 : i32
    %c0_i32_1 = arith.constant 0 : i32
    return %c0_i32, %c0_i32_0 : i32, i32
  }
  func.func @transform_6(%arg0: i32) -> (i32, i32) {
    %c0_i32 = arith.constant 0 : i32
    %c0_i32_0 = arith.constant 0 : i32
    %c0_i32_1 = arith.constant 0 : i32
    return %c0_i32, %c0_i32_0 : i32, i32
  }
  func.func @transform_7(%arg0: i32) -> (i32, i32) {
    %c0_i32 = arith.constant 0 : i32
    %c0_i32_0 = arith.constant 0 : i32
    %c0_i32_1 = arith.constant 0 : i32
    return %c0_i32, %c0_i32_0 : i32, i32
  }
  func.func @transform_8(%arg0: i32) -> (i32, i32) {
    %c0_i32 = arith.constant 0 : i32
    %c0_i32_0 = arith.constant 0 : i32
    %c0_i32_1 = arith.constant 0 : i32
    return %c0_i32, %c0_i32_0 : i32, i32
  }
  func.func @transform_9(%arg0: i32) -> (i32, i32) {
    %c0_i32 = arith.constant 0 : i32
    %c0_i32_0 = arith.constant 0 : i32
    %c0_i32_1 = arith.constant 0 : i32
    return %c0_i32, %c0_i32_0 : i32, i32
  }
  func.func @transform_10(%arg0: i32) -> (i32, i32, i32) {
    %c0_i32 = arith.constant 0 : i32
    %c0_i32_0 = arith.constant 0 : i32
    %c0_i32_1 = arith.constant 0 : i32
    %c0_i32_2 = arith.constant 0 : i32
    return %c0_i32, %c0_i32_0, %c0_i32_1 : i32, i32, i32
  }
  func.func @transform_11(%arg0: i32) -> (i32, i32) {
    %c0_i32 = arith.constant 0 : i32
    %c0_i32_0 = arith.constant 0 : i32
    %c0_i32_1 = arith.constant 0 : i32
    return %c0_i32, %c0_i32_0 : i32, i32
  }
  func.func @transform_12(%arg0: i32) -> (i32, i32) {
    %c0_i32 = arith.constant 0 : i32
    %c0_i32_0 = arith.constant 0 : i32
    %c0_i32_1 = arith.constant 0 : i32
    return %c0_i32, %c0_i32_0 : i32, i32
  }
  func.func @transform_13(%arg0: i32) -> (i32, i32) {
    %c0_i32 = arith.constant 0 : i32
    %c0_i32_0 = arith.constant 0 : i32
    %c0_i32_1 = arith.constant 0 : i32
    return %c0_i32, %c0_i32_0 : i32, i32
  }
  func.func @transform_14(%arg0: i32) -> (i32, i32) {
    %c0_i32 = arith.constant 0 : i32
    %c0_i32_0 = arith.constant 0 : i32
    %c0_i32_1 = arith.constant 0 : i32
    return %c0_i32, %c0_i32_0 : i32, i32
  }
  func.func @transform_15(%arg0: i32) -> (i32, i32) {
    %c0_i32 = arith.constant 0 : i32
    %c0_i32_0 = arith.constant 0 : i32
    %c0_i32_1 = arith.constant 0 : i32
    return %c0_i32, %c0_i32_0 : i32, i32
  }
  func.func @transform_16(%arg0: i32) -> (i32, i32, i32) {
    %c0_i32 = arith.constant 0 : i32
    %c0_i32_0 = arith.constant 0 : i32
    %c0_i32_1 = arith.constant 0 : i32
    return %arg0, %c0_i32, %c0_i32_0 : i32, i32, i32
  }
}

</mosaic_0001>

<llo_original>
// kernel: tpu_custom_call.1
$region0: #{tpu_custom_call.1}
  #allocation0 [shape = 'u32[]', space=smem, size = 0x4, offset = 0x4, fixed_abs, tag = 'smem constant byte address 0x4 - core index']
  #allocation1 [shape = 'u32[144,128]{1,0:T(1,128)}', space=vmem, size = 0x12000, scoped, tag = 'internal scratch']
  #allocation2 [shape = 'f32[6,256]{1,0:T(8,128)}', space=vmem, size = 0x2000, scoped, tag = 'scratch operand']
  #allocation3 [shape = 'f32[1,1]{1,0:T(1,128)S(1)}', space=vmem, size = 0x200, scoped, tag = 'scoped memory for tpu_custom_call.1']
  %s0 = inlined_call_operand.hbm [shape: f32[2,4,256], index: 0, kind: input, shape index: {}]
  %s1 = inlined_call_operand.hbm [shape: s32[1,256], index: 1, kind: input, shape index: {}]
  %s2 = inlined_call_operand.hbm [shape: f32[4,1], index: 2, kind: input, shape index: {}]
  %s3 = inlined_call_operand.<no memory space> [shape: f32[1,1], index: 3, kind: input, shape index: {}]
  %s4 = inlined_call_operand.hbm [shape: f32[4,4], index: 4, kind: input, shape index: {}]
  %s5 = inlined_call_operand.hbm [shape: f32[4,1], index: 5, kind: input, shape index: {}]
  %s6 = inlined_call_operand.hbm [shape: f32[4,1], index: 6, kind: input, shape index: {}]
  %s7 = inlined_call_operand.hbm [shape: f32[4,1], index: 7, kind: input, shape index: {}]
  %s8 = inlined_call_operand.hbm [shape: f32[4,4], index: 8, kind: input, shape index: {}]
  %s9 = inlined_call_operand.hbm [shape: f32[4,1], index: 9, kind: input, shape index: {}]
  %s10 = inlined_call_operand.hbm [shape: f32[9,6,6], index: 10, kind: input, shape index: {}]
  %s11 = inlined_call_operand.hbm [shape: f32[6,1], index: 11, kind: input, shape index: {}]
  %s12 = inlined_call_operand.hbm [shape: f32[6,1], index: 12, kind: input, shape index: {}]
  %s13 = inlined_call_operand.hbm [shape: f32[6,6], index: 13, kind: input, shape index: {}]
  %s14 = inlined_call_operand.hbm [shape: f32[6,1], index: 14, kind: input, shape index: {}]
  %s15 = inlined_call_operand.hbm [shape: f32[6,1], index: 15, kind: input, shape index: {}]
  %s16 = inlined_call_operand.hbm [shape: f32[2,6,256], index: 16, kind: output, shape index: {}]
  %s17 = sld [smem:[#allocation0]]
  $region157: #{tpu_custom_call.1} parent=0
    _
  %s19 = ssub.s32 1, %s17
  %s20 = scalar_select 0, %s19, %s17
  %v21 = vstv %s3
  %22 = vst [vmem:[#allocation3] sm:$0x1] %v21
  $region1: #{tpu_custom_call.1} parent=0
    #allocation4 [shape = 'u8[8192]{0}', space=vmem, size = 0x2000, scoped, tag = 'input window, operand 0']
    #allocation5 [shape = 's32[2]{0}', space=sflag, size = 0x8, scoped, tag = 'scoped memory for tpu_custom_call.1']
    #allocation6 [shape = 's32[2]{0}', space=sflag, size = 0x8, scoped, tag = 'scoped memory for tpu_custom_call.1']
    #allocation7 [shape = 'u8[1024]{0}', space=vmem, size = 0x400, scoped, tag = 'input window, operand 1, single buffered']
    #allocation8 [shape = 's32[1]{0}', space=sflag, size = 0x4, scoped, tag = 'scoped memory for tpu_custom_call.1']
    #allocation9 [shape = 'u8[2048]{0}', space=vmem, size = 0x800, scoped, tag = 'input window, operand 2, single buffered']
    #allocation10 [shape = 'u8[2048]{0}', space=vmem, size = 0x800, scoped, tag = 'input window, operand 4, single buffered']
    #allocation11 [shape = 's32[1]{0}', space=sflag, size = 0x4, scoped, tag = 'scoped memory for tpu_custom_call.1']
    #allocation12 [shape = 'u8[2048]{0}', space=vmem, size = 0x800, scoped, tag = 'input window, operand 5, single buffered']
    #allocation13 [shape = 'u8[2048]{0}', space=vmem, size = 0x800, scoped, tag = 'input window, operand 6, single buffered']
    #allocation14 [shape = 's32[1]{0}', space=sflag, size = 0x4, scoped, tag = 'scoped memory for tpu_custom_call.1']
    #allocation15 [shape = 'u8[2048]{0}', space=vmem, size = 0x800, scoped, tag = 'input window, operand 7, single buffered']
    #allocation16 [shape = 'u8[2048]{0}', space=vmem, size = 0x800, scoped, tag = 'input window, operand 8, single buffered']
    #allocation17 [shape = 's32[1]{0}', space=sflag, size = 0x4, scoped, tag = 'scoped memory for tpu_custom_call.1']
    #allocation18 [shape = 'u8[2048]{0}', space=vmem, size = 0x800, scoped, tag = 'input window, operand 9, single buffered']
    #allocation19 [shape = 'u8[36864]{0}', space=vmem, size = 0x9000, scoped, tag = 'input window, operand 10, single buffered']
    #allocation20 [shape = 's32[1]{0}', space=sflag, size = 0x4, scoped, tag = 'scoped memory for tpu_custom_call.1']
    #allocation21 [shape = 'u8[4096]{0}', space=vmem, size = 0x1000, scoped, tag = 'input window, operand 11, single buffered']
    #allocation22 [shape = 'u8[4096]{0}', space=vmem, size = 0x1000, scoped, tag = 'input window, operand 12, single buffered']
    #allocation23 [shape = 's32[1]{0}', space=sflag, size = 0x4, scoped, tag = 'scoped memory for tpu_custom_call.1']
    #allocation24 [shape = 'u8[4096]{0}', space=vmem, size = 0x1000, scoped, tag = 'input window, operand 13, single buffered']
    #allocation25 [shape = 'u8[4096]{0}', space=vmem, size = 0x1000, scoped, tag = 'input window, operand 14, single buffered']
    #allocation26 [shape = 's32[1]{0}', space=sflag, size = 0x4, scoped, tag = 'scoped memory for tpu_custom_call.1']
    #allocation27 [shape = 'u8[4096]{0}', space=vmem, size = 0x1000, scoped, tag = 'input window, operand 15, single buffered']
    #allocation28 [shape = 'u8[16384]{0}', space=vmem, size = 0x4000, scoped, tag = 'output window, operand 0']
    %23 = vsyncpa [#allocation5], 0
    %s24 = scalar_lea.sflag [#allocation5], 1
    %25 = vsyncpa %s24, 0
    %26 = vsyncpa [#allocation8], 0
    %27 = vsyncpa [#allocation11], 0
    %28 = vsyncpa [#allocation14], 0
    %29 = vsyncpa [#allocation17], 0
    %30 = vsyncpa [#allocation20], 0
    %31 = vsyncpa [#allocation23], 0
    %32 = vsyncpa [#allocation26], 0
    %33 = vsyncpa [#allocation6], 0
    %s34 = scalar_lea.sflag [#allocation6], 1
    %35 = vsyncpa %s34, 0
    loop: start=0, step=1, limit=4
    $region2: #{tpu_custom_call.1} parent=1 // loop_pre_header
      _
    $region3: #{tpu_custom_call.1} parent=1 // loop_header
      %s37 = sphi 0, %s41
      %p38 = scmp.ge.s32.totalorder %s37, 4
      %s47 = sphi 0, %s49
      %s50 = sphi 0, %s47
      %s51 = sphi 0, %s50
      %s67 = sphi 0, %s51
      %s71 = sphi 0, %s71
      %s73 = sphi 0, %s71
      %s74 = sphi 0, %s73
      %s88 = sphi 0, %s74
      %s92 = sphi 0, %s92
      %s94 = sphi 0, %s92
      %s95 = sphi 0, %s94
      %s109 = sphi 0, %s95
      %s113 = sphi 0, %s113
      %s115 = sphi 0, %s113
      %s116 = sphi 0, %s115
      %s130 = sphi 0, %s116
      %s134 = sphi 0, %s134
      %s136 = sphi 0, %s134
      %s137 = sphi 0, %s136
      %s151 = sphi 0, %s137
      %s155 = sphi 0, %s155
      %s157 = sphi 0, %s155
      %s158 = sphi 0, %s157
      %s172 = sphi 0, %s158
      %s176 = sphi 0, %s176
      %s178 = sphi 0, %s176
      %s179 = sphi 0, %s178
      %s193 = sphi 0, %s179
      %s197 = sphi 0, %s197
      %s199 = sphi 0, %s197
      %s200 = sphi 0, %s199
      %s214 = sphi 0, %s200
      %s218 = sphi 0, %s218
      %s220 = sphi 0, %s218
      %s221 = sphi 0, %s220
      %s235 = sphi 0, %s221
      %s239 = sphi 0, %s239
      %s241 = sphi 0, %s239
      %s242 = sphi 0, %s241
      %s256 = sphi 0, %s242
      %s260 = sphi 0, %s260
      %s262 = sphi 0, %s260
      %s263 = sphi 0, %s262
      %s277 = sphi 0, %s263
      %s281 = sphi 0, %s281
      %s283 = sphi 0, %s281
      %s284 = sphi 0, %s283
      %s298 = sphi 0, %s284
      %s302 = sphi 0, %s302
      %s304 = sphi 0, %s302
      %s305 = sphi 0, %s304
      %s319 = sphi 0, %s305
      %s323 = sphi 0, %s323
      %s325 = sphi 0, %s323
      %s326 = sphi 0, %s325
      %s340 = sphi 0, %s326
      %s344 = sphi 0, %s344
      %s346 = sphi 0, %s344
      %s347 = sphi 0, %s346
      %s361 = sphi 0, %s347
      %s365 = sphi 0, %s365
      %s367 = sphi 0, %s365
      %s368 = sphi 0, %s367
      %s382 = sphi 0, %s368
      %s388 = sphi 0, %s390
      %s391 = sphi 0, %s388
      %s392 = sphi 0, %s391
      %s408 = sphi 0, %s392
    $region4: #{tpu_custom_call.1} parent=1 // loop_header_branch
      %40 = sbr.rel (%p38) target = $region8
    $region5: #{tpu_custom_call.1} parent=1 // loop_body
      %s42 = ssub.s32 %s37, 1
      %s43 = ssub.s32 %s37, 2
      %s44 = sadd.s32 %s37, 1
      %s45 = ssub.s32 %s37, %s44
      %p46 = scmp.eq.s32.totalorder %s45, 0
      %s48 = sadd.s32 %s47, 1
      %s49 = scalar_select %p46, %s47, %s48
      %p52 = pneg %p46
      %p53 = scmp.eq.s32.totalorder %s37, 1
      %p54 = por %p52, %p53
      %p55 = scmp.ne.s32.totalorder %s47, %s50
      %p56 = scmp.eq.s32.totalorder %s37, 0
      %p57 = por %p55, %p56
      %p58 = scmp.ne.s32.totalorder %s47, %s50
      %p59 = scmp.eq.s32.totalorder %s42, 1
      %p60 = por %p58, %p59
      %p61 = scmp.ne.s32.totalorder %s50, %s51
      %p62 = scmp.eq.s32.totalorder %s42, 0
      %p63 = por %p61, %p62
      %p64 = scmp.ne.s32.totalorder %s50, %s51
      %p65 = scmp.eq.s32.totalorder %s43, 1
      %p66 = por %p64, %p65
      %p68 = scmp.ne.s32.totalorder %s51, %s67
      %p69 = scmp.eq.s32.totalorder %s43, 0
      %p70 = por %p68, %p69
      %s72 = sadd.s32 %s71, 1
      %p75 = scmp.eq.s32.totalorder %s37, 1
      %p76 = scmp.ne.s32.totalorder %s71, %s73
      %p77 = scmp.eq.s32.totalorder %s37, 0
      %p78 = por %p76, %p77
      %p79 = scmp.ne.s32.totalorder %s71, %s73
      %p80 = scmp.eq.s32.totalorder %s42, 1
      %p81 = por %p79, %p80
      %p82 = scmp.ne.s32.totalorder %s73, %s74
      %p83 = scmp.eq.s32.totalorder %s42, 0
      %p84 = por %p82, %p83
      %p85 = scmp.ne.s32.totalorder %s73, %s74
      %p86 = scmp.eq.s32.totalorder %s43, 1
      %p87 = por %p85, %p86
      %p89 = scmp.ne.s32.totalorder %s74, %s88
      %p90 = scmp.eq.s32.totalorder %s43, 0
      %p91 = por %p89, %p90
      %s93 = sadd.s32 %s92, 1
      %p96 = scmp.eq.s32.totalorder %s37, 1
      %p97 = scmp.ne.s32.totalorder %s92, %s94
      %p98 = scmp.eq.s32.totalorder %s37, 0
      %p99 = por %p97, %p98
      %p100 = scmp.ne.s32.totalorder %s92, %s94
      %p101 = scmp.eq.s32.totalorder %s42, 1
      %p102 = por %p100, %p101
      %p103 = scmp.ne.s32.totalorder %s94, %s95
      %p104 = scmp.eq.s32.totalorder %s42, 0
      %p105 = por %p103, %p104
      %p106 = scmp.ne.s32.totalorder %s94, %s95
      %p107 = scmp.eq.s32.totalorder %s43, 1
      %p108 = por %p106, %p107
      %p110 = scmp.ne.s32.totalorder %s95, %s109
      %p111 = scmp.eq.s32.totalorder %s43, 0
      %p112 = por %p110, %p111
      %s114 = sadd.s32 %s113, 1
      %p117 = scmp.eq.s32.totalorder %s37, 1
      %p118 = scmp.ne.s32.totalorder %s113, %s115
      %p119 = scmp.eq.s32.totalorder %s37, 0
      %p120 = por %p118, %p119
      %p121 = scmp.ne.s32.totalorder %s113, %s115
      %p122 = scmp.eq.s32.totalorder %s42, 1
      %p123 = por %p121, %p122
      %p124 = scmp.ne.s32.totalorder %s115, %s116
      %p125 = scmp.eq.s32.totalorder %s42, 0
      %p126 = por %p124, %p125
      %p127 = scmp.ne.s32.totalorder %s115, %s116
      %p128 = scmp.eq.s32.totalorder %s43, 1
      %p129 = por %p127, %p128
      %p131 = scmp.ne.s32.totalorder %s116, %s130
      %p132 = scmp.eq.s32.totalorder %s43, 0
      %p133 = por %p131, %p132
      %s135 = sadd.s32 %s134, 1
      %p138 = scmp.eq.s32.totalorder %s37, 1
      %p139 = scmp.ne.s32.totalorder %s134, %s136
      %p140 = scmp.eq.s32.totalorder %s37, 0
      %p141 = por %p139, %p140
      %p142 = scmp.ne.s32.totalorder %s134, %s136
      %p143 = scmp.eq.s32.totalorder %s42, 1
      %p144 = por %p142, %p143
      %p145 = scmp.ne.s32.totalorder %s136, %s137
      %p146 = scmp.eq.s32.totalorder %s42, 0
      %p147 = por %p145, %p146
      %p148 = scmp.ne.s32.totalorder %s136, %s137
      %p149 = scmp.eq.s32.totalorder %s43, 1
      %p150 = por %p148, %p149
      %p152 = scmp.ne.s32.totalorder %s137, %s151
      %p153 = scmp.eq.s32.totalorder %s43, 0
      %p154 = por %p152, %p153
      %s156 = sadd.s32 %s155, 1
      %p159 = scmp.eq.s32.totalorder %s37, 1
      %p160 = scmp.ne.s32.totalorder %s155, %s157
      %p161 = scmp.eq.s32.totalorder %s37, 0
      %p162 = por %p160, %p161
      %p163 = scmp.ne.s32.totalorder %s155, %s157
      %p164 = scmp.eq.s32.totalorder %s42, 1
      %p165 = por %p163, %p164
      %p166 = scmp.ne.s32.totalorder %s157, %s158
      %p167 = scmp.eq.s32.totalorder %s42, 0
      %p168 = por %p166, %p167
      %p169 = scmp.ne.s32.totalorder %s157, %s158
      %p170 = scmp.eq.s32.totalorder %s43, 1
      %p171 = por %p169, %p170
      %p173 = scmp.ne.s32.totalorder %s158, %s172
      %p174 = scmp.eq.s32.totalorder %s43, 0
      %p175 = por %p173, %p174
      %s177 = sadd.s32 %s176, 1
      %p180 = scmp.eq.s32.totalorder %s37, 1
      %p181 = scmp.ne.s32.totalorder %s176, %s178
      %p182 = scmp.eq.s32.totalorder %s37, 0
      %p183 = por %p181, %p182
      %p184 = scmp.ne.s32.totalorder %s176, %s178
      %p185 = scmp.eq.s32.totalorder %s42, 1
      %p186 = por %p184, %p185
      %p187 = scmp.ne.s32.totalorder %s178, %s179
      %p188 = scmp.eq.s32.totalorder %s42, 0
      %p189 = por %p187, %p188
      %p190 = scmp.ne.s32.totalorder %s178, %s179
      %p191 = scmp.eq.s32.totalorder %s43, 1
      %p192 = por %p190, %p191
      %p194 = scmp.ne.s32.totalorder %s179, %s193
      %p195 = scmp.eq.s32.totalorder %s43, 0
      %p196 = por %p194, %p195
      %s198 = sadd.s32 %s197, 1
      %p201 = scmp.eq.s32.totalorder %s37, 1
      %p202 = scmp.ne.s32.totalorder %s197, %s199
      %p203 = scmp.eq.s32.totalorder %s37, 0
      %p204 = por %p202, %p203
      %p205 = scmp.ne.s32.totalorder %s197, %s199
      %p206 = scmp.eq.s32.totalorder %s42, 1
      %p207 = por %p205, %p206
      %p208 = scmp.ne.s32.totalorder %s199, %s200
      %p209 = scmp.eq.s32.totalorder %s42, 0
      %p210 = por %p208, %p209
      %p211 = scmp.ne.s32.totalorder %s199, %s200
      %p212 = scmp.eq.s32.totalorder %s43, 1
      %p213 = por %p211, %p212
      %p215 = scmp.ne.s32.totalorder %s200, %s214
      %p216 = scmp.eq.s32.totalorder %s43, 0
      %p217 = por %p215, %p216
      %s219 = sadd.s32 %s218, 1
      %p222 = scmp.eq.s32.totalorder %s37, 1
      %p223 = scmp.ne.s32.totalorder %s218, %s220
      %p224 = scmp.eq.s32.totalorder %s37, 0
      %p225 = por %p223, %p224
      %p226 = scmp.ne.s32.totalorder %s218, %s220
      %p227 = scmp.eq.s32.totalorder %s42, 1
      %p228 = por %p226, %p227
      %p229 = scmp.ne.s32.totalorder %s220, %s221
      %p230 = scmp.eq.s32.totalorder %s42, 0
      %p231 = por %p229, %p230
      %p232 = scmp.ne.s32.totalorder %s220, %s221
      %p233 = scmp.eq.s32.totalorder %s43, 1
      %p234 = por %p232, %p233
      %p236 = scmp.ne.s32.totalorder %s221, %s235
      %p237 = scmp.eq.s32.totalorder %s43, 0
      %p238 = por %p236, %p237
      %s240 = sadd.s32 %s239, 1
      %p243 = scmp.eq.s32.totalorder %s37, 1
      %p244 = scmp.ne.s32.totalorder %s239, %s241
      %p245 = scmp.eq.s32.totalorder %s37, 0
      %p246 = por %p244, %p245
      %p247 = scmp.ne.s32.totalorder %s239, %s241
      %p248 = scmp.eq.s32.totalorder %s42, 1
      %p249 = por %p247, %p248
      %p250 = scmp.ne.s32.totalorder %s241, %s242
      %p251 = scmp.eq.s32.totalorder %s42, 0
      %p252 = por %p250, %p251
      %p253 = scmp.ne.s32.totalorder %s241, %s242
      %p254 = scmp.eq.s32.totalorder %s43, 1
      %p255 = por %p253, %p254
      %p257 = scmp.ne.s32.totalorder %s242, %s256
      %p258 = scmp.eq.s32.totalorder %s43, 0
      %p259 = por %p257, %p258
      %s261 = sadd.s32 %s260, 1
      %p264 = scmp.eq.s32.totalorder %s37, 1
      %p265 = scmp.ne.s32.totalorder %s260, %s262
      %p266 = scmp.eq.s32.totalorder %s37, 0
      %p267 = por %p265, %p266
      %p268 = scmp.ne.s32.totalorder %s260, %s262
      %p269 = scmp.eq.s32.totalorder %s42, 1
      %p270 = por %p268, %p269
      %p271 = scmp.ne.s32.totalorder %s262, %s263
      %p272 = scmp.eq.s32.totalorder %s42, 0
      %p273 = por %p271, %p272
      %p274 = scmp.ne.s32.totalorder %s262, %s263
      %p275 = scmp.eq.s32.totalorder %s43, 1
      %p276 = por %p274, %p275
      %p278 = scmp.ne.s32.totalorder %s263, %s277
      %p279 = scmp.eq.s32.totalorder %s43, 0
      %p280 = por %p278, %p279
      %s282 = sadd.s32 %s281, 1
      %p285 = scmp.eq.s32.totalorder %s37, 1
      %p286 = scmp.ne.s32.totalorder %s281, %s283
      %p287 = scmp.eq.s32.totalorder %s37, 0
      %p288 = por %p286, %p287
      %p289 = scmp.ne.s32.totalorder %s281, %s283
      %p290 = scmp.eq.s32.totalorder %s42, 1
      %p291 = por %p289, %p290
      %p292 = scmp.ne.s32.totalorder %s283, %s284
      %p293 = scmp.eq.s32.totalorder %s42, 0
      %p294 = por %p292, %p293
      %p295 = scmp.ne.s32.totalorder %s283, %s284
      %p296 = scmp.eq.s32.totalorder %s43, 1
      %p297 = por %p295, %p296
      %p299 = scmp.ne.s32.totalorder %s284, %s298
      %p300 = scmp.eq.s32.totalorder %s43, 0
      %p301 = por %p299, %p300
      %s303 = sadd.s32 %s302, 1
      %p306 = scmp.eq.s32.totalorder %s37, 1
      %p307 = scmp.ne.s32.totalorder %s302, %s304
      %p308 = scmp.eq.s32.totalorder %s37, 0
      %p309 = por %p307, %p308
      %p310 = scmp.ne.s32.totalorder %s302, %s304
      %p311 = scmp.eq.s32.totalorder %s42, 1
      %p312 = por %p310, %p311
      %p313 = scmp.ne.s32.totalorder %s304, %s305
      %p314 = scmp.eq.s32.totalorder %s42, 0
      %p315 = por %p313, %p314
      %p316 = scmp.ne.s32.totalorder %s304, %s305
      %p317 = scmp.eq.s32.totalorder %s43, 1
      %p318 = por %p316, %p317
      %p320 = scmp.ne.s32.totalorder %s305, %s319
      %p321 = scmp.eq.s32.totalorder %s43, 0
      %p322 = por %p320, %p321
      %s324 = sadd.s32 %s323, 1
      %p327 = scmp.eq.s32.totalorder %s37, 1
      %p328 = scmp.ne.s32.totalorder %s323, %s325
      %p329 = scmp.eq.s32.totalorder %s37, 0
      %p330 = por %p328, %p329
      %p331 = scmp.ne.s32.totalorder %s323, %s325
      %p332 = scmp.eq.s32.totalorder %s42, 1
      %p333 = por %p331, %p332
      %p334 = scmp.ne.s32.totalorder %s325, %s326
      %p335 = scmp.eq.s32.totalorder %s42, 0
      %p336 = por %p334, %p335
      %p337 = scmp.ne.s32.totalorder %s325, %s326
      %p338 = scmp.eq.s32.totalorder %s43, 1
      %p339 = por %p337, %p338
      %p341 = scmp.ne.s32.totalorder %s326, %s340
      %p342 = scmp.eq.s32.totalorder %s43, 0
      %p343 = por %p341, %p342
      %s345 = sadd.s32 %s344, 1
      %p348 = scmp.eq.s32.totalorder %s37, 1
      %p349 = scmp.ne.s32.totalorder %s344, %s346
      %p350 = scmp.eq.s32.totalorder %s37, 0
      %p351 = por %p349, %p350
      %p352 = scmp.ne.s32.totalorder %s344, %s346
      %p353 = scmp.eq.s32.totalorder %s42, 1
      %p354 = por %p352, %p353
      %p355 = scmp.ne.s32.totalorder %s346, %s347
      %p356 = scmp.eq.s32.totalorder %s42, 0
      %p357 = por %p355, %p356
      %p358 = scmp.ne.s32.totalorder %s346, %s347
      %p359 = scmp.eq.s32.totalorder %s43, 1
      %p360 = por %p358, %p359
      %p362 = scmp.ne.s32.totalorder %s347, %s361
      %p363 = scmp.eq.s32.totalorder %s43, 0
      %p364 = por %p362, %p363
      %s366 = sadd.s32 %s365, 1
      %p369 = scmp.eq.s32.totalorder %s37, 1
      %p370 = scmp.ne.s32.totalorder %s365, %s367
      %p371 = scmp.eq.s32.totalorder %s37, 0
      %p372 = por %p370, %p371
      %p373 = scmp.ne.s32.totalorder %s365, %s367
      %p374 = scmp.eq.s32.totalorder %s42, 1
      %p375 = por %p373, %p374
      %p376 = scmp.ne.s32.totalorder %s367, %s368
      %p377 = scmp.eq.s32.totalorder %s42, 0
      %p378 = por %p376, %p377
      %p379 = scmp.ne.s32.totalorder %s367, %s368
      %p380 = scmp.eq.s32.totalorder %s43, 1
      %p381 = por %p379, %p380
      %p383 = scmp.ne.s32.totalorder %s368, %s382
      %p384 = scmp.eq.s32.totalorder %s43, 0
      %p385 = por %p383, %p384
      %s386 = ssub.s32 %s37, %s44
      %p387 = scmp.eq.s32.totalorder %s386, 0
      %s389 = sadd.s32 %s388, 1
      %s390 = scalar_select %p387, %s388, %s389
      %p393 = pneg %p387
      %p394 = scmp.eq.s32.totalorder %s37, 1
      %p395 = por %p393, %p394
      %p396 = scmp.ne.s32.totalorder %s388, %s391
      %p397 = scmp.eq.s32.totalorder %s37, 0
      %p398 = por %p396, %p397
      %p399 = scmp.ne.s32.totalorder %s388, %s391
      %p400 = scmp.eq.s32.totalorder %s42, 1
      %p401 = por %p399, %p400
      %p402 = scmp.ne.s32.totalorder %s391, %s392
      %p403 = scmp.eq.s32.totalorder %s42, 0
      %p404 = por %p402, %p403
      %p405 = scmp.ne.s32.totalorder %s391, %s392
      %p406 = scmp.eq.s32.totalorder %s43, 1
      %p407 = por %p405, %p406
      %p409 = scmp.ne.s32.totalorder %s392, %s408
      %p410 = scmp.eq.s32.totalorder %s43, 0
      %p411 = por %p409, %p410
      %p412 = scmp.le.s32.totalorder 1, %s37
      %p413 = scmp.lt.s32.totalorder %s37, 3
      %p414 = pnand %p412, %p413
      %p415 = pneg %p414
      // Predicated region
      $region9: #{tpu_custom_call.1} parent=5 // pred_check
        _
      $region10: #{tpu_custom_call.1} parent=5 // pred_check_branch
        %417 = sbr.rel (%p414) target = $region12
      $region11: #{tpu_custom_call.1} parent=5 // pred_region
        %s418 = ssub.s32 %s37, 1
        // Predicated region
        $region13: #{tpu_custom_call.1} parent=11 // pred_check
          %p419 = pneg %p84
        $region14: #{tpu_custom_call.1} parent=11 // pred_check_branch
          %421 = sbr.rel (%p419) target = $region16
        $region15: #{tpu_custom_call.1} parent=11 // pred_region
          %s423 = ssub.s32 32, 32
          %424 = vsyncadd [#allocation8], %s423
          %s426 = sshll.u32 [#allocation7], 4
          %s427 = int_to_ptr.vmem [resolvable:$true] %s426
          %429 = dma.hbm_to_vmem [thread:$0]  %s1, 32, %s427, [#allocation8]
        $region16: #{tpu_custom_call.1} parent=11 // pred_fallthru
          _
        // Predicated region
        $region17: #{tpu_custom_call.1} parent=11 // pred_check
          %p430 = pneg %p105
        $region18: #{tpu_custom_call.1} parent=11 // pred_check_branch
          %432 = sbr.rel (%p430) target = $region20
        $region19: #{tpu_custom_call.1} parent=11 // pred_region
          %s434 = ssub.s32 64, 64
          %435 = vsyncadd [#allocation8], %s434
          %s437 = sshll.u32 [#allocation9], 4
          %s438 = int_to_ptr.vmem [resolvable:$true] %s437
          %440 = dma.hbm_to_vmem [thread:$0]  %s2, 64, %s438, [#allocation8]
        $region20: #{tpu_custom_call.1} parent=11 // pred_fallthru
          _
        // Predicated region
        $region21: #{tpu_custom_call.1} parent=11 // pred_check
          %p441 = pneg %p126
        $region22: #{tpu_custom_call.1} parent=11 // pred_check_branch
          %443 = sbr.rel (%p441) target = $region24
        $region23: #{tpu_custom_call.1} parent=11 // pred_region
          _
        $region24: #{tpu_custom_call.1} parent=11 // pred_fallthru
          _
        // Predicated region
        $region25: #{tpu_custom_call.1} parent=11 // pred_check
          %p444 = pneg %p147
        $region26: #{tpu_custom_call.1} parent=11 // pred_check_branch
          %446 = sbr.rel (%p444) target = $region28
        $region27: #{tpu_custom_call.1} parent=11 // pred_region
          %s448 = ssub.s32 64, 64
          %449 = vsyncadd [#allocation11], %s448
          %s451 = sshll.u32 [#allocation10], 4
          %s452 = int_to_ptr.vmem [resolvable:$true] %s451
          %454 = dma.hbm_to_vmem [thread:$0]  %s4, 64, %s452, [#allocation11]
        $region28: #{tpu_custom_call.1} parent=11 // pred_fallthru
          _
        // Predicated region
        $region29: #{tpu_custom_call.1} parent=11 // pred_check
          %p455 = pneg %p168
        $region30: #{tpu_custom_call.1} parent=11 // pred_check_branch
          %457 = sbr.rel (%p455) target = $region32
        $region31: #{tpu_custom_call.1} parent=11 // pred_region
          %s459 = ssub.s32 64, 64
          %460 = vsyncadd [#allocation11], %s459
          %s462 = sshll.u32 [#allocation12], 4
          %s463 = int_to_ptr.vmem [resolvable:$true] %s462
          %465 = dma.hbm_to_vmem [thread:$0]  %s5, 64, %s463, [#allocation11]
        $region32: #{tpu_custom_call.1} parent=11 // pred_fallthru
          _
        // Predicated region
        $region33: #{tpu_custom_call.1} parent=11 // pred_check
          %p466 = pneg %p189
        $region34: #{tpu_custom_call.1} parent=11 // pred_check_branch
          %468 = sbr.rel (%p466) target = $region36
        $region35: #{tpu_custom_call.1} parent=11 // pred_region
          %s470 = ssub.s32 64, 64
          %471 = vsyncadd [#allocation14], %s470
          %s473 = sshll.u32 [#allocation13], 4
          %s474 = int_to_ptr.vmem [resolvable:$true] %s473
          %476 = dma.hbm_to_vmem [thread:$0]  %s6, 64, %s474, [#allocation14]
        $region36: #{tpu_custom_call.1} parent=11 // pred_fallthru
          _
        // Predicated region
        $region37: #{tpu_custom_call.1} parent=11 // pred_check
          %p477 = pneg %p210
        $region38: #{tpu_custom_call.1} parent=11 // pred_check_branch
          %479 = sbr.rel (%p477) target = $region40
        $region39: #{tpu_custom_call.1} parent=11 // pred_region
          %s481 = ssub.s32 64, 64
          %482 = vsyncadd [#allocation14], %s481
          %s484 = sshll.u32 [#allocation15], 4
          %s485 = int_to_ptr.vmem [resolvable:$true] %s484
          %487 = dma.hbm_to_vmem [thread:$0]  %s7, 64, %s485, [#allocation14]
        $region40: #{tpu_custom_call.1} parent=11 // pred_fallthru
          _
        // Predicated region
        $region41: #{tpu_custom_call.1} parent=11 // pred_check
          %p488 = pneg %p231
        $region42: #{tpu_custom_call.1} parent=11 // pred_check_branch
          %490 = sbr.rel (%p488) target = $region44
        $region43: #{tpu_custom_call.1} parent=11 // pred_region
          %s492 = ssub.s32 64, 64
          %493 = vsyncadd [#allocation17], %s492
          %s495 = sshll.u32 [#allocation16], 4
          %s496 = int_to_ptr.vmem [resolvable:$true] %s495
          %498 = dma.hbm_to_vmem [thread:$0]  %s8, 64, %s496, [#allocation17]
        $region44: #{tpu_custom_call.1} parent=11 // pred_fallthru
          _
        // Predicated region
        $region45: #{tpu_custom_call.1} parent=11 // pred_check
          %p499 = pneg %p252
        $region46: #{tpu_custom_call.1} parent=11 // pred_check_branch
          %501 = sbr.rel (%p499) target = $region48
        $region47: #{tpu_custom_call.1} parent=11 // pred_region
          %s503 = ssub.s32 64, 64
          %504 = vsyncadd [#allocation17], %s503
          %s506 = sshll.u32 [#allocation18], 4
          %s507 = int_to_ptr.vmem [resolvable:$true] %s506
          %509 = dma.hbm_to_vmem [thread:$0]  %s9, 64, %s507, [#allocation17]
        $region48: #{tpu_custom_call.1} parent=11 // pred_fallthru
          _
        // Predicated region
        $region49: #{tpu_custom_call.1} parent=11 // pred_check
          %p510 = pneg %p273
        $region50: #{tpu_custom_call.1} parent=11 // pred_check_branch
          %512 = sbr.rel (%p510) target = $region52
        $region51: #{tpu_custom_call.1} parent=11 // pred_region
          %s514 = ssub.s32 1152, 1152
          %515 = vsyncadd [#allocation20], %s514
          %s516 = sshll.u32 [#allocation19], 4
          %s517 = int_to_ptr.vmem [resolvable:$true] %s516
          %522 = dma.hbm_to_vmem [thread:$0]  %s10, 1152, %s517, [#allocation20], 128, 128, 8
        $region52: #{tpu_custom_call.1} parent=11 // pred_fallthru
          _
        // Predicated region
        $region53: #{tpu_custom_call.1} parent=11 // pred_check
          %p523 = pneg %p294
        $region54: #{tpu_custom_call.1} parent=11 // pred_check_branch
          %525 = sbr.rel (%p523) target = $region56
        $region55: #{tpu_custom_call.1} parent=11 // pred_region
          %s527 = ssub.s32 128, 128
          %528 = vsyncadd [#allocation20], %s527
          %s530 = sshll.u32 [#allocation21], 4
          %s531 = int_to_ptr.vmem [resolvable:$true] %s530
          %533 = dma.hbm_to_vmem [thread:$0]  %s11, 128, %s531, [#allocation20]
        $region56: #{tpu_custom_call.1} parent=11 // pred_fallthru
          _
        // Predicated region
        $region57: #{tpu_custom_call.1} parent=11 // pred_check
          %p534 = pneg %p315
        $region58: #{tpu_custom_call.1} parent=11 // pred_check_branch
          %536 = sbr.rel (%p534) target = $region60
        $region59: #{tpu_custom_call.1} parent=11 // pred_region
          %s538 = ssub.s32 128, 128
          %539 = vsyncadd [#allocation23], %s538
          %s541 = sshll.u32 [#allocation22], 4
          %s542 = int_to_ptr.vmem [resolvable:$true] %s541
          %544 = dma.hbm_to_vmem [thread:$0]  %s12, 128, %s542, [#allocation23]
        $region60: #{tpu_custom_call.1} parent=11 // pred_fallthru
          _
        // Predicated region
        $region61: #{tpu_custom_call.1} parent=11 // pred_check
          %p545 = pneg %p336
        $region62: #{tpu_custom_call.1} parent=11 // pred_check_branch
          %547 = sbr.rel (%p545) target = $region64
        $region63: #{tpu_custom_call.1} parent=11 // pred_region
          %s549 = ssub.s32 128, 128
          %550 = vsyncadd [#allocation23], %s549
          %s552 = sshll.u32 [#allocation24], 4
          %s553 = int_to_ptr.vmem [resolvable:$true] %s552
          %555 = dma.hbm_to_vmem [thread:$0]  %s13, 128, %s553, [#allocation23]
        $region64: #{tpu_custom_call.1} parent=11 // pred_fallthru
          _
        // Predicated region
        $region65: #{tpu_custom_call.1} parent=11 // pred_check
          %p556 = pneg %p357
        $region66: #{tpu_custom_call.1} parent=11 // pred_check_branch
          %558 = sbr.rel (%p556) target = $region68
        $region67: #{tpu_custom_call.1} parent=11 // pred_region
          %s560 = ssub.s32 128, 128
          %561 = vsyncadd [#allocation26], %s560
          %s563 = sshll.u32 [#allocation25], 4
          %s564 = int_to_ptr.vmem [resolvable:$true] %s563
          %566 = dma.hbm_to_vmem [thread:$0]  %s14, 128, %s564, [#allocation26]
        $region68: #{tpu_custom_call.1} parent=11 // pred_fallthru
          _
        // Predicated region
        $region69: #{tpu_custom_call.1} parent=11 // pred_check
          %p567 = pneg %p378
        $region70: #{tpu_custom_call.1} parent=11 // pred_check_branch
          %569 = sbr.rel (%p567) target = $region72
        $region71: #{tpu_custom_call.1} parent=11 // pred_region
          %s571 = ssub.s32 128, 128
          %572 = vsyncadd [#allocation26], %s571
          %s574 = sshll.u32 [#allocation27], 4
          %s575 = int_to_ptr.vmem [resolvable:$true] %s574
          %577 = dma.hbm_to_vmem [thread:$0]  %s15, 128, %s575, [#allocation26]
        $region72: #{tpu_custom_call.1} parent=11 // pred_fallthru
          _
      $region12: #{tpu_custom_call.1} parent=5 // pred_fallthru
        _
      %p578 = scmp.lt.s32.totalorder %s37, 2
      // Predicated region
      $region73: #{tpu_custom_call.1} parent=5 // pred_check
        %p579 = pneg %p578
      $region74: #{tpu_custom_call.1} parent=5 // pred_check_branch
        %581 = sbr.rel (%p579) target = $region76
      $region75: #{tpu_custom_call.1} parent=5 // pred_region
        // Predicated region
        $region77: #{tpu_custom_call.1} parent=75 // pred_check
          %p582 = pneg %p57
        $region78: #{tpu_custom_call.1} parent=75 // pred_check_branch
          %584 = sbr.rel (%p582) target = $region80
        $region79: #{tpu_custom_call.1} parent=75 // pred_region
          %s585 = sand.u32 %s47, 1
          %s586 = scalar_lea.sflag [#allocation5], %s585
          %s587 = sand.u32 %s47, 1
          %s588 = smul.addr %s587, 8
          %s589 = scalar_lea.vmem [#allocation4], %s588
          %s591 = ssub.s32 128, 128
          %592 = vsyncadd %s586, %s591
          %s593 = smul.addr %s37, 2
          %s594 = smul.addr %s593, 64
          %s595 = scalar_lea.hbm %s0, %s594
          %s597 = sshll.u32 %s589, 4
          %s598 = int_to_ptr.vmem [resolvable:$true] %s597
          %600 = dma.hbm_to_vmem [thread:$0]  %s595, 128, %s598, %s586
        $region80: #{tpu_custom_call.1} parent=75 // pred_fallthru
          _
      $region76: #{tpu_custom_call.1} parent=5 // pred_fallthru
        _
      %p601 = scmp.le.s32.totalorder 1, %s37
      %p602 = scmp.lt.s32.totalorder %s37, 3
      %p603 = pnand %p601, %p602
      %p604 = pneg %p603
      // Predicated region
      $region81: #{tpu_custom_call.1} parent=5 // pred_check
        _
      $region82: #{tpu_custom_call.1} parent=5 // pred_check_branch
        %606 = sbr.rel (%p603) target = $region84
      $region83: #{tpu_custom_call.1} parent=5 // pred_region
        %s607 = ssub.s32 %s37, 1
        %s608 = sand.u32 %s50, 1
        %s609 = scalar_lea.sflag [#allocation5], %s608
        %s610 = sand.u32 %s50, 1
        %s611 = smul.addr %s610, 8
        %s612 = scalar_lea.vmem [#allocation4], %s611
        // Predicated region
        $region85: #{tpu_custom_call.1} parent=83 // pred_check
          %p613 = pneg %p63
        $region86: #{tpu_custom_call.1} parent=83 // pred_check_branch
          %615 = sbr.rel (%p613) target = $region88
        $region87: #{tpu_custom_call.1} parent=83 // pred_region
          %616 = dma.done %s609, 128
        $region88: #{tpu_custom_call.1} parent=83 // pred_fallthru
          _
        // Predicated region
        $region89: #{tpu_custom_call.1} parent=83 // pred_check
          %p617 = pneg %p84
        $region90: #{tpu_custom_call.1} parent=83 // pred_check_branch
          %619 = sbr.rel (%p617) target = $region92
        $region91: #{tpu_custom_call.1} parent=83 // pred_region
          %620 = dma.done [#allocation8], 32
        $region92: #{tpu_custom_call.1} parent=83 // pred_fallthru
          _
        // Predicated region
        $region93: #{tpu_custom_call.1} parent=83 // pred_check
          %p621 = pneg %p105
        $region94: #{tpu_custom_call.1} parent=83 // pred_check_branch
          %623 = sbr.rel (%p621) target = $region96
        $region95: #{tpu_custom_call.1} parent=83 // pred_region
          %624 = dma.done [#allocation8], 64
        $region96: #{tpu_custom_call.1} parent=83 // pred_fallthru
          _
        // Predicated region
        $region97: #{tpu_custom_call.1} parent=83 // pred_check
          %p625 = pneg %p147
        $region98: #{tpu_custom_call.1} parent=83 // pred_check_branch
          %627 = sbr.rel (%p625) target = $region100
        $region99: #{tpu_custom_call.1} parent=83 // pred_region
          %628 = dma.done [#allocation11], 64
        $region100: #{tpu_custom_call.1} parent=83 // pred_fallthru
          _
        // Predicated region
        $region101: #{tpu_custom_call.1} parent=83 // pred_check
          %p629 = pneg %p168
        $region102: #{tpu_custom_call.1} parent=83 // pred_check_branch
          %631 = sbr.rel (%p629) target = $region104
        $region103: #{tpu_custom_call.1} parent=83 // pred_region
          %632 = dma.done [#allocation11], 64
        $region104: #{tpu_custom_call.1} parent=83 // pred_fallthru
          _
        // Predicated region
        $region105: #{tpu_custom_call.1} parent=83 // pred_check
          %p633 = pneg %p189
        $region106: #{tpu_custom_call.1} parent=83 // pred_check_branch
          %635 = sbr.rel (%p633) target = $region108
        $region107: #{tpu_custom_call.1} parent=83 // pred_region
          %636 = dma.done [#allocation14], 64
        $region108: #{tpu_custom_call.1} parent=83 // pred_fallthru
          _
        // Predicated region
        $region109: #{tpu_custom_call.1} parent=83 // pred_check
          %p637 = pneg %p210
        $region110: #{tpu_custom_call.1} parent=83 // pred_check_branch
          %639 = sbr.rel (%p637) target = $region112
        $region111: #{tpu_custom_call.1} parent=83 // pred_region
          %640 = dma.done [#allocation14], 64
        $region112: #{tpu_custom_call.1} parent=83 // pred_fallthru
          _
        // Predicated region
        $region113: #{tpu_custom_call.1} parent=83 // pred_check
          %p641 = pneg %p231
        $region114: #{tpu_custom_call.1} parent=83 // pred_check_branch
          %643 = sbr.rel (%p641) target = $region116
        $region115: #{tpu_custom_call.1} parent=83 // pred_region
          %644 = dma.done [#allocation17], 64
        $region116: #{tpu_custom_call.1} parent=83 // pred_fallthru
          _
        // Predicated region
        $region117: #{tpu_custom_call.1} parent=83 // pred_check
          %p645 = pneg %p252
        $region118: #{tpu_custom_call.1} parent=83 // pred_check_branch
          %647 = sbr.rel (%p645) target = $region120
        $region119: #{tpu_custom_call.1} parent=83 // pred_region
          %648 = dma.done [#allocation17], 64
        $region120: #{tpu_custom_call.1} parent=83 // pred_fallthru
          _
        // Predicated region
        $region121: #{tpu_custom_call.1} parent=83 // pred_check
          %p649 = pneg %p273
        $region122: #{tpu_custom_call.1} parent=83 // pred_check_branch
          %651 = sbr.rel (%p649) target = $region124
        $region123: #{tpu_custom_call.1} parent=83 // pred_region
          %652 = dma.done [#allocation20], 1152
        $region124: #{tpu_custom_call.1} parent=83 // pred_fallthru
          _
        // Predicated region
        $region125: #{tpu_custom_call.1} parent=83 // pred_check
          %p653 = pneg %p294
        $region126: #{tpu_custom_call.1} parent=83 // pred_check_branch
          %655 = sbr.rel (%p653) target = $region128
        $region127: #{tpu_custom_call.1} parent=83 // pred_region
          %656 = dma.done [#allocation20], 128
        $region128: #{tpu_custom_call.1} parent=83 // pred_fallthru
          _
        // Predicated region
        $region129: #{tpu_custom_call.1} parent=83 // pred_check
          %p657 = pneg %p315
        $region130: #{tpu_custom_call.1} parent=83 // pred_check_branch
          %659 = sbr.rel (%p657) target = $region132
        $region131: #{tpu_custom_call.1} parent=83 // pred_region
          %660 = dma.done [#allocation23], 128
        $region132: #{tpu_custom_call.1} parent=83 // pred_fallthru
          _
        // Predicated region
        $region133: #{tpu_custom_call.1} parent=83 // pred_check
          %p661 = pneg %p336
        $region134: #{tpu_custom_call.1} parent=83 // pred_check_branch
          %663 = sbr.rel (%p661) target = $region136
        $region135: #{tpu_custom_call.1} parent=83 // pred_region
          %664 = dma.done [#allocation23], 128
        $region136: #{tpu_custom_call.1} parent=83 // pred_fallthru
          _
        // Predicated region
        $region137: #{tpu_custom_call.1} parent=83 // pred_check
          %p665 = pneg %p357
        $region138: #{tpu_custom_call.1} parent=83 // pred_check_branch
          %667 = sbr.rel (%p665) target = $region140
        $region139: #{tpu_custom_call.1} parent=83 // pred_region
          %668 = dma.done [#allocation26], 128
        $region140: #{tpu_custom_call.1} parent=83 // pred_fallthru
          _
        // Predicated region
        $region141: #{tpu_custom_call.1} parent=83 // pred_check
          %p669 = pneg %p378
        $region142: #{tpu_custom_call.1} parent=83 // pred_check_branch
          %671 = sbr.rel (%p669) target = $region144
        $region143: #{tpu_custom_call.1} parent=83 // pred_region
          %672 = dma.done [#allocation26], 128
        $region144: #{tpu_custom_call.1} parent=83 // pred_fallthru
          _
        %s673 = sand.u32 %s50, 1
        %s674 = scalar_lea.sflag [#allocation5], %s673
        %s675 = sand.u32 %s50, 1
        %s676 = smul.addr %s675, 8
        %s677 = scalar_lea.vmem [#allocation4], %s676
        %p678 = pneg %p63
        %p679 = pneg %p60
        %p680 = pneg %p84
        %p681 = pneg %p81
        %p682 = pneg %p105
        %p683 = pneg %p102
        %p684 = pneg %p126
        %p685 = pneg %p123
        %p686 = pneg %p147
        %p687 = pneg %p144
        %p688 = pneg %p168
        %p689 = pneg %p165
        %p690 = pneg %p189
        %p691 = pneg %p186
        %p692 = pneg %p210
        %p693 = pneg %p207
        %p694 = pneg %p231
        %p695 = pneg %p228
        %p696 = pneg %p252
        %p697 = pneg %p249
        %p698 = pneg %p273
        %p699 = pneg %p270
        %p700 = pneg %p294
        %p701 = pneg %p291
        %p702 = pneg %p315
        %p703 = pneg %p312
        %p704 = pneg %p336
        %p705 = pneg %p333
        %p706 = pneg %p357
        %p707 = pneg %p354
        %p708 = pneg %p378
        %p709 = pneg %p375
        %p710 = pneg %p404
        %p711 = pneg %p401
        %s712 = sand.u32 %s391, 1
        %s713 = scalar_lea.sflag [#allocation6], %s712
        %s714 = sand.u32 %s391, 1
        %s715 = smul.addr %s714, 16
        %s716 = scalar_lea.vmem [#allocation28], %s715
        %v717 = vld [vmem:[%s612] sm:$0xff]
        %v718 = vld [vmem:[#allocation7] sm:$0x3]
        %v719 = vlaneseq
        %v720 = vand.u32 %v719, 127
        %v721 = vadd.s32 %v720, 128
        %v722 = vld [vmem:[#allocation9] sm:$0xf]
        %724 = vset.pattern.permute.xlu0 0
        %725 = vperm.xlu0 %724, %v722
        %v726 = vpop.permute.xlu0 %725
        %v728 = vunpack.c.l.s4 839922192
        %v729 = vunpack.c.0.s8 %v728
        %v730 = vlaneseq
        %v731 = vshrl.u32 %v730, 7
        %v732 = vsub.s32 %v729, %v731
        %v733 = vrot.slane %v726, %v732
        %v735 = vmul.f32 %v717, %v733
        %v737 = vcombine.high %v735, %v735
        %vm739 = vcmask 1043456
        %v740 = vsel %vm739, %v735, 0.0
        %v741 = vrot.slane %v740, 4
        %v742 = vadd.f32 %v740, %v741
        %v743 = vrot.slane %v742, 2
        %v744 = vadd.f32 %v742, %v743
        %v745 = vrot.slane %v744, 1
        %v746 = vadd.f32 %v744, %v745
        %v747 = vsel %vm739, %v737, 0.0
        %v748 = vrot.slane %v747, 4
        %v749 = vadd.f32 %v747, %v748
        %v750 = vrot.slane %v749, 2
        %v751 = vadd.f32 %v749, %v750
        %v752 = vrot.slane %v751, 1
        %v753 = vadd.f32 %v751, %v752
        %v754 = vld [vmem:[#allocation3] sm:$0x1]
        %756 = vset.pattern.permute.xlu0 0
        %757 = vperm.xlu0 %756, %v754
        %v758 = vpop.permute.xlu0 %757
        %v760 = vlaneseq
        %v761 = vshrl.u32 %v760, 7
        %v762 = vsub.s32 0, %v761
        %v763 = vrot.slane %v758, %v762
        %v764 = vadd.f32 %v746, %v763
        %v765 = vadd.f32 %v753, %v763
        %v766 = vmax.f32 %v764, %v765
        %767 = vmax.xlane.f32.xlu0 %v766
        %v768 = vpop.xlane.xlu0 %767
        %v769 = vsub.f32 %v764, %v768
        %v770 = vsub.f32 %v765, %v768
        %v771 = vmul.f32 %v769, 1.442695
        %v772 = vpow.pop %v771
        %v773 = vmul.f32 %v770, 1.442695
        %v774 = vpow.pop %v773
        %v775 = vadd.f32 %v772, %v774
        %776 = vadd.xlane.f32.xlu0 %v775
        %v777 = vpop.xlane.xlu0 %776
        %v778 = vrcp.pop %v777
        %v779 = vmul.f32 %v772, %v778
        %v780 = vmul.f32 %v774, %v778
        %v783 = vcombine.low %v779, %v780
        %v785 = vmul.f32 %v717, %v783
        %v787 = vcombine.high %v785, %v785
        %v789 = vsel %vm739, %v785, 0.0
        %v790 = vsel %vm739, %v787, 0.0
        %v791 = vadd.f32 %v789, %v790
        %792 = vadd.xlane.f32.xlu0 %v791
        %v793 = vpop.xlane.xlu0 %792
        %v794 = vld [vmem:[#allocation10] sm:$0xf]
        %v795 = vld [vmem:[#allocation12] sm:$0xf]
        %vm796 = vcmask 31744
        %v798 = vsel %vm796, %v794, 0
        %v801 = vsel %vm739, %v793, 0
        %803 = vmatprep.subr.mxu0 0.0
        %804 = vmatpush1.msra.mxu0 %v801
        %805 = vmatprep.subr.mxu0 0.0
        %806 = vmatpush1.msra.mxu0 0.0
        %807 = vmatprep.subr.mxu0 0.0
        %808 = vmatpush1.msra.mxu0 0.0
        %809 = vmatprep.subr.mxu0 0.0
        %810 = vmatpush1.msra.mxu0 0.0
        %811 = vmatprep.subr.mxu0 0.0
        %812 = vmatpush1.msra.mxu0 0.0
        %813 = vmatprep.subr.mxu0 0.0
        %814 = vmatpush1.msra.mxu0 0.0
        %815 = vmatprep.subr.mxu0 0.0
        %816 = vmatpush1.msra.mxu0 0.0
        %817 = vmatprep.subr.mxu0 0.0
        %818 = vmatpush1.msra.mxu0 0.0
        %819 = vmatprep.subr.mxu0 0.0
        %820 = vmatpush1.msra.mxu0 0.0
        %821 = vmatprep.subr.mxu0 0.0
        %822 = vmatpush1.msra.mxu0 0.0
        %823 = vmatprep.subr.mxu0 0.0
        %824 = vmatpush1.msra.mxu0 0.0
        %825 = vmatprep.subr.mxu0 0.0
        %826 = vmatpush1.msra.mxu0 0.0
        %827 = vmatprep.subr.mxu0 0.0
        %828 = vmatpush1.msra.mxu0 0.0
        %829 = vmatprep.subr.mxu0 0.0
        %830 = vmatpush1.msra.mxu0 0.0
        %831 = vmatprep.subr.mxu0 0.0
        %832 = vmatpush1.msra.mxu0 0.0
        %833 = vmatprep.subr.mxu0 0.0
        %834 = vmatpush1.msra.mxu0 0.0
        %835 = vmatprep.subr.mxu0 0.0
        %836 = vmatpush1.msra.mxu0 0.0
        %837 = vmatprep.subr.mxu0 0.0
        %838 = vmatpush1.msra.mxu0 0.0
        %839 = vmatprep.subr.mxu0 0.0
        %840 = vmatpush1.msra.mxu0 0.0
        %841 = vmatprep.subr.mxu0 0.0
        %842 = vmatpush1.msra.mxu0 0.0
        %843 = vmatprep.subr.mxu0 0.0
        %844 = vmatpush1.msra.mxu0 0.0
        %845 = vmatprep.subr.mxu0 0.0
        %846 = vmatpush1.msra.mxu0 0.0
        %847 = vmatprep.subr.mxu0 0.0
        %848 = vmatpush1.msra.mxu0 0.0
        %849 = vmatprep.subr.mxu0 0.0
        %850 = vmatpush1.msra.mxu0 0.0
        %851 = vmatprep.subr.mxu0 0.0
        %852 = vmatpush1.msra.mxu0 0.0
        %853 = vmatprep.subr.mxu0 0.0
        %854 = vmatpush1.msra.mxu0 0.0
        %855 = vmatprep.subr.mxu0 0.0
        %856 = vmatpush1.msra.mxu0 0.0
        %857 = vmatprep.subr.mxu0 0.0
        %858 = vmatpush1.msra.mxu0 0.0
        %859 = vmatprep.subr.mxu0 0.0
        %860 = vmatpush1.msra.mxu0 0.0
        %861 = vmatprep.subr.mxu0 0.0
        %862 = vmatpush1.msra.mxu0 0.0
        %863 = vmatprep.subr.mxu0 0.0
        %864 = vmatpush1.msra.mxu0 0.0
        %865 = vmatprep.subr.mxu0 0.0
        %866 = vmatpush1.msra.mxu0 0.0
        %867 = vmatprep.mubr.f32.mxu0 0.0
        %868 = vmatmul.mubr.f32.gmra.mrb[0].mxu0 %v798
        %v869 = vpop.f32.mrb[0].mxu0
        %v870 = vadd.f32 %v795, %v869
        %v871 = vpop.f32.mrb[0].mxu0
        %872 = vdwg.mxu0
        %vm873 = vcmask 3072
        %v874 = vsel %vm873, %v870, 0.0
        %v875 = vrot.slane %v874, 4
        %v876 = vadd.f32 %v874, %v875
        %v877 = vrot.slane %v876, 2
        %v878 = vadd.f32 %v876, %v877
        %v879 = vrot.slane %v878, 1
        %v880 = vadd.f32 %v878, %v879
        %v881 = vrcp.pop 4.0
        %v882 = vmul.f32 %v880, %v881
        %v883 = vsub.f32 %v870, %v882
        %v884 = vmul.f32 %v883, %v883
        %v885 = vsel %vm873, %v884, 0.0
        %v886 = vrot.slane %v885, 4
        %v887 = vadd.f32 %v885, %v886
        %v888 = vrot.slane %v887, 2
        %v889 = vadd.f32 %v887, %v888
        %v890 = vrot.slane %v889, 1
        %v891 = vadd.f32 %v889, %v890
        %v892 = vmul.f32 %v891, %v881
        %v893 = vadd.f32 %v892, 1e-05
        %v894 = vrsqrt.pop %v893
        %v895 = vmul.f32 %v883, %v894
        %v896 = vld [vmem:[#allocation13] sm:$0xf]
        %v897 = vmul.f32 %v895, %v896
        %v898 = vld [vmem:[#allocation15] sm:$0xf]
        %v899 = vadd.f32 %v897, %v898
        %v900 = vmax.f32 %v899, 0.0
        %v901 = vld [vmem:[#allocation16] sm:$0xf]
        %v902 = vld [vmem:[#allocation18] sm:$0xf]
        %v904 = vsel %vm796, %v901, 0
        %v907 = vsel %vm739, %v900, 0
        %909 = vmatprep.subr.mxu0 0.0
        %910 = vmatpush1.msra.mxu0 %v907
        %911 = vmatprep.subr.mxu0 0.0
        %912 = vmatpush1.msra.mxu0 0.0
        %913 = vmatprep.subr.mxu0 0.0
        %914 = vmatpush1.msra.mxu0 0.0
        %915 = vmatprep.subr.mxu0 0.0
        %916 = vmatpush1.msra.mxu0 0.0
        %917 = vmatprep.subr.mxu0 0.0
        %918 = vmatpush1.msra.mxu0 0.0
        %919 = vmatprep.subr.mxu0 0.0
        %920 = vmatpush1.msra.mxu0 0.0
        %921 = vmatprep.subr.mxu0 0.0
        %922 = vmatpush1.msra.mxu0 0.0
        %923 = vmatprep.subr.mxu0 0.0
        %924 = vmatpush1.msra.mxu0 0.0
        %925 = vmatprep.subr.mxu0 0.0
        %926 = vmatpush1.msra.mxu0 0.0
        %927 = vmatprep.subr.mxu0 0.0
        %928 = vmatpush1.msra.mxu0 0.0
        %929 = vmatprep.subr.mxu0 0.0
        %930 = vmatpush1.msra.mxu0 0.0
        %931 = vmatprep.subr.mxu0 0.0
        %932 = vmatpush1.msra.mxu0 0.0
        %933 = vmatprep.subr.mxu0 0.0
        %934 = vmatpush1.msra.mxu0 0.0
        %935 = vmatprep.subr.mxu0 0.0
        %936 = vmatpush1.msra.mxu0 0.0
        %937 = vmatprep.subr.mxu0 0.0
        %938 = vmatpush1.msra.mxu0 0.0
        %939 = vmatprep.subr.mxu0 0.0
        %940 = vmatpush1.msra.mxu0 0.0
        %941 = vmatprep.subr.mxu0 0.0
        %942 = vmatpush1.msra.mxu0 0.0
        %943 = vmatprep.subr.mxu0 0.0
        %944 = vmatpush1.msra.mxu0 0.0
        %945 = vmatprep.subr.mxu0 0.0
        %946 = vmatpush1.msra.mxu0 0.0
        %947 = vmatprep.subr.mxu0 0.0
        %948 = vmatpush1.msra.mxu0 0.0
        %949 = vmatprep.subr.mxu0 0.0
        %950 = vmatpush1.msra.mxu0 0.0
        %951 = vmatprep.subr.mxu0 0.0
        %952 = vmatpush1.msra.mxu0 0.0
        %953 = vmatprep.subr.mxu0 0.0
        %954 = vmatpush1.msra.mxu0 0.0
        %955 = vmatprep.subr.mxu0 0.0
        %956 = vmatpush1.msra.mxu0 0.0
        %957 = vmatprep.subr.mxu0 0.0
        %958 = vmatpush1.msra.mxu0 0.0
        %959 = vmatprep.subr.mxu0 0.0
        %960 = vmatpush1.msra.mxu0 0.0
        %961 = vmatprep.subr.mxu0 0.0
        %962 = vmatpush1.msra.mxu0 0.0
        %963 = vmatprep.subr.mxu0 0.0
        %964 = vmatpush1.msra.mxu0 0.0
        %965 = vmatprep.subr.mxu0 0.0
        %966 = vmatpush1.msra.mxu0 0.0
        %967 = vmatprep.subr.mxu0 0.0
        %968 = vmatpush1.msra.mxu0 0.0
        %969 = vmatprep.subr.mxu0 0.0
        %970 = vmatpush1.msra.mxu0 0.0
        %971 = vmatprep.subr.mxu0 0.0
        %972 = vmatpush1.msra.mxu0 0.0
        %973 = vmatprep.mubr.f32.mxu0 0.0
        %974 = vmatmul.mubr.f32.gmra.mrb[0].mxu0 %v904
        %v975 = vpop.f32.mrb[0].mxu0
        %v976 = vadd.f32 %v902, %v975
        %v977 = vpop.f32.mrb[0].mxu0
        %978 = vdwg.mxu0
        %980 = vset.pattern.permute.xlu0 0
        %981 = vperm.xlu0 %980, %v976
        %v982 = vpop.permute.xlu0 %981
        %v984 = vunpack.c.l.s4 839922192
        %v985 = vunpack.c.0.s8 %v984
        %v986 = vlaneseq
        %v987 = vshrl.u32 %v986, 7
        %v988 = vsub.s32 %v985, %v987
        %v989 = vrot.slane %v982, %v988
        %v991 = vadd.f32 %v717, %v989
        %v993 = vcombine.high %v717, %v717
        %v995 = vsel %vm739, %v717, 0.0
        %v996 = vrot.slane %v995, 4
        %v997 = vadd.f32 %v995, %v996
        %v998 = vrot.slane %v997, 2
        %v999 = vadd.f32 %v997, %v998
        %v1000 = vrot.slane %v999, 1
        %v1001 = vadd.f32 %v999, %v1000
        %v1002 = vsel %vm739, %v993, 0.0
        %v1003 = vrot.slane %v1002, 4
        %v1004 = vadd.f32 %v1002, %v1003
        %v1005 = vrot.slane %v1004, 2
        %v1006 = vadd.f32 %v1004, %v1005
        %v1007 = vrot.slane %v1006, 1
        %v1008 = vadd.f32 %v1006, %v1007
        %1009 = vrot.lane.b32.xlu0 %v1001, 17
        %v1010 = vpop.permute.xlu0 %1009
        %1011 = vrot.lane.b32.xlu0 %v1008, 17
        %v1012 = vpop.permute.xlu0 %1011
        %vm1013 = vcmp.lt.s32.totalorder %v720, 17
        %v1014 = vsel %vm1013, %v1010, %v1012
        %v1015 = vsel %vm1013, %v1012, %v1010
        %vm1016 = vcmp.ge.s32.totalorder %v718, 1
        %vm1017 = vcmp.ge.s32.totalorder %v720, 16
        %vm1018 = vcmp.ge.s32.totalorder %v721, 16
        %v1019 = vsel %vm1017, 1, 0
        %v1020 = vsel %vm1018, 1, 0
        %v1021 = vcombine.low %v1019, %v1020
        %v1023 = vunpack.c.l.s4 1966171168
        %v1024 = vunpack.c.0.s8 %v1023
        %v1025 = vlaneseq
        %v1026 = vshrl.u32 %v1025, 7
        %v1027 = vsub.s32 %v1024, %v1026
        %v1028 = vrot.slane %v1021, %v1027
        %v1030 = vunpack.c.l.s4 1966171168
        %v1031 = vunpack.c.0.s8 %v1030
        %v1032 = vlaneseq
        %v1033 = vshrl.u32 %v1032, 7
        %v1034 = vsub.s32 %v1031, %v1033
        %v1035 = vrot.slane %v1028, %v1034
        %vm1036 = vcmp.ne.s32.totalorder %v1035, 0
        %vm1037 = vmand %vm1016, %vm1036
        %v1040 = vcombine.low %v1015, %v1014
        %v1042 = vunpack.c.l.s4 1966171168
        %v1043 = vunpack.c.0.s8 %v1042
        %v1044 = vlaneseq
        %v1045 = vshrl.u32 %v1044, 7
        %v1046 = vsub.s32 %v1043, %v1045
        %v1047 = vrot.slane %v1040, %v1046
        %v1049 = vunpack.c.l.s4 1966171168
        %v1050 = vunpack.c.0.s8 %v1049
        %v1051 = vlaneseq
        %v1052 = vshrl.u32 %v1051, 7
        %v1053 = vsub.s32 %v1050, %v1052
        %v1054 = vrot.slane %v1047, %v1053
        %v1056 = vsel %vm1037, %v1054, 0.0
        %v1057 = vmul.f32 %v1056, -1.0
        %v1058 = vadd.f32 %v1057, 0.0
        %1059 = vrot.lane.b32.xlu0 %v1001, 16
        %v1060 = vpop.permute.xlu0 %1059
        %1061 = vrot.lane.b32.xlu0 %v1008, 16
        %v1062 = vpop.permute.xlu0 %1061
        %vm1063 = vcmp.lt.s32.totalorder %v720, 16
        %v1064 = vsel %vm1063, %v1060, %v1062
        %v1065 = vsel %vm1063, %v1062, %v1060
        %v1066 = vsel %vm1017, %v1065, 0.0
        %v1067 = vsel %vm1018, %v1064, 0.0
        %v1068 = vmul.f32 %v1066, -2.0
        %v1069 = vmul.f32 %v1067, -2.0
        %v1072 = vcombine.low %v1068, %v1069
        %v1074 = vunpack.c.l.s4 1966171168
        %v1075 = vunpack.c.0.s8 %v1074
        %v1076 = vlaneseq
        %v1077 = vshrl.u32 %v1076, 7
        %v1078 = vsub.s32 %v1075, %v1077
        %v1079 = vrot.slane %v1072, %v1078
        %v1081 = vunpack.c.l.s4 1966171168
        %v1082 = vunpack.c.0.s8 %v1081
        %v1083 = vlaneseq
        %v1084 = vshrl.u32 %v1083, 7
        %v1085 = vsub.s32 %v1082, %v1084
        %v1086 = vrot.slane %v1079, %v1085
        %v1088 = vadd.f32 %v1058, %v1086
        %1089 = vrot.lane.b32.xlu0 %v1001, 15
        %v1090 = vpop.permute.xlu0 %1089
        %1091 = vrot.lane.b32.xlu0 %v1008, 15
        %v1092 = vpop.permute.xlu0 %1091
        %vm1093 = vcmp.lt.s32.totalorder %v720, 15
        %v1094 = vsel %vm1093, %v1090, %v1092
        %v1095 = vsel %vm1093, %v1092, %v1090
        %vm1096 = vcmp.lt.s32.totalorder %v718, 15
        %vm1097 = vmand %vm1096, %vm1036
        %v1100 = vcombine.low %v1095, %v1094
        %v1102 = vunpack.c.l.s4 1966171168
        %v1103 = vunpack.c.0.s8 %v1102
        %v1104 = vlaneseq
        %v1105 = vshrl.u32 %v1104, 7
        %v1106 = vsub.s32 %v1103, %v1105
        %v1107 = vrot.slane %v1100, %v1106
        %v1109 = vunpack.c.l.s4 1966171168
        %v1110 = vunpack.c.0.s8 %v1109
        %v1111 = vlaneseq
        %v1112 = vshrl.u32 %v1111, 7
        %v1113 = vsub.s32 %v1110, %v1112
        %v1114 = vrot.slane %v1107, %v1113
        %v1116 = vsel %vm1097, %v1114, 0.0
        %v1117 = vadd.f32 %v1058, %v1116
        %v1118 = vmul.f32 %v1116, -1.0
        %v1119 = vadd.f32 %v1088, %v1118
        %1120 = vrot.lane.b32.xlu0 %v1001, 1
        %v1121 = vpop.permute.xlu0 %1120
        %1122 = vrot.lane.b32.xlu0 %v1008, 1
        %v1123 = vpop.permute.xlu0 %1122
        %vm1124 = vcmp.lt.s32.totalorder %v720, 1
        %v1125 = vsel %vm1124, %v1121, %v1123
        %v1126 = vsel %vm1124, %v1123, %v1121
        %v1129 = vcombine.low %v1126, %v1125
        %v1131 = vunpack.c.l.s4 1966171168
        %v1132 = vunpack.c.0.s8 %v1131
        %v1133 = vlaneseq
        %v1134 = vshrl.u32 %v1133, 7
        %v1135 = vsub.s32 %v1132, %v1134
        %v1136 = vrot.slane %v1129, %v1135
        %v1138 = vunpack.c.l.s4 1966171168
        %v1139 = vunpack.c.0.s8 %v1138
        %v1140 = vlaneseq
        %v1141 = vshrl.u32 %v1140, 7
        %v1142 = vsub.s32 %v1139, %v1141
        %v1143 = vrot.slane %v1136, %v1142
        %v1145 = vsel %vm1016, %v1143, 0.0
        %v1146 = vmul.f32 %v1145, -2.0
        %v1147 = vadd.f32 %v1117, %v1146
        %1148 = vrot.lane.b32.xlu0 %v1001, 127
        %v1149 = vpop.permute.xlu0 %1148
        %1150 = vrot.lane.b32.xlu0 %v1008, 127
        %v1151 = vpop.permute.xlu0 %1150
        %vm1152 = vcmp.lt.s32.totalorder %v720, 127
        %v1153 = vsel %vm1152, %v1149, %v1151
        %v1154 = vsel %vm1152, %v1151, %v1149
        %v1157 = vcombine.low %v1153, %v1154
        %v1159 = vunpack.c.l.s4 1966171168
        %v1160 = vunpack.c.0.s8 %v1159
        %v1161 = vlaneseq
        %v1162 = vshrl.u32 %v1161, 7
        %v1163 = vsub.s32 %v1160, %v1162
        %v1164 = vrot.slane %v1157, %v1163
        %v1166 = vunpack.c.l.s4 1966171168
        %v1167 = vunpack.c.0.s8 %v1166
        %v1168 = vlaneseq
        %v1169 = vshrl.u32 %v1168, 7
        %v1170 = vsub.s32 %v1167, %v1169
        %v1171 = vrot.slane %v1164, %v1170
        %v1173 = vsel %vm1096, %v1171, 0.0
        %v1174 = vmul.f32 %v1173, 2.0
        %v1175 = vadd.f32 %v1147, %v1174
        %1176 = vrot.lane.b32.xlu0 %v1001, 113
        %v1177 = vpop.permute.xlu0 %1176
        %1178 = vrot.lane.b32.xlu0 %v1008, 113
        %v1179 = vpop.permute.xlu0 %1178
        %vm1180 = vcmp.lt.s32.totalorder %v720, 113
        %v1181 = vsel %vm1180, %v1177, %v1179
        %v1182 = vsel %vm1180, %v1179, %v1177
        %vm1183 = vcmp.lt.s32.totalorder %v720, 240
        %vm1184 = vcmp.lt.s32.totalorder %v721, 240
        %v1185 = vsel %vm1183, 1, 0
        %v1186 = vsel %vm1184, 1, 0
        %v1187 = vcombine.low %v1185, %v1186
        %v1189 = vunpack.c.l.s4 1966171168
        %v1190 = vunpack.c.0.s8 %v1189
        %v1191 = vlaneseq
        %v1192 = vshrl.u32 %v1191, 7
        %v1193 = vsub.s32 %v1190, %v1192
        %v1194 = vrot.slane %v1187, %v1193
        %v1196 = vunpack.c.l.s4 1966171168
        %v1197 = vunpack.c.0.s8 %v1196
        %v1198 = vlaneseq
        %v1199 = vshrl.u32 %v1198, 7
        %v1200 = vsub.s32 %v1197, %v1199
        %v1201 = vrot.slane %v1194, %v1200
        %vm1202 = vcmp.ne.s32.totalorder %v1201, 0
        %vm1203 = vmand %vm1016, %vm1202
        %v1206 = vcombine.low %v1181, %v1182
        %v1208 = vunpack.c.l.s4 1966171168
        %v1209 = vunpack.c.0.s8 %v1208
        %v1210 = vlaneseq
        %v1211 = vshrl.u32 %v1210, 7
        %v1212 = vsub.s32 %v1209, %v1211
        %v1213 = vrot.slane %v1206, %v1212
        %v1215 = vunpack.c.l.s4 1966171168
        %v1216 = vunpack.c.0.s8 %v1215
        %v1217 = vlaneseq
        %v1218 = vshrl.u32 %v1217, 7
        %v1219 = vsub.s32 %v1216, %v1218
        %v1220 = vrot.slane %v1213, %v1219
        %v1222 = vsel %vm1203, %v1220, 0.0
        %v1223 = vmul.f32 %v1222, -1.0
        %v1224 = vadd.f32 %v1175, %v1223
        %v1225 = vadd.f32 %v1119, %v1222
        %1226 = vrot.lane.b32.xlu0 %v1001, 112
        %v1227 = vpop.permute.xlu0 %1226
        %1228 = vrot.lane.b32.xlu0 %v1008, 112
        %v1229 = vpop.permute.xlu0 %1228
        %vm1230 = vcmp.lt.s32.totalorder %v720, 112
        %v1231 = vsel %vm1230, %v1227, %v1229
        %v1232 = vsel %vm1230, %v1229, %v1227
        %v1233 = vsel %vm1183, %v1231, 0.0
        %v1234 = vsel %vm1184, %v1232, 0.0
        %v1235 = vmul.f32 %v1233, 2.0
        %v1236 = vmul.f32 %v1234, 2.0
        %v1239 = vcombine.low %v1235, %v1236
        %v1241 = vunpack.c.l.s4 1966171168
        %v1242 = vunpack.c.0.s8 %v1241
        %v1243 = vlaneseq
        %v1244 = vshrl.u32 %v1243, 7
        %v1245 = vsub.s32 %v1242, %v1244
        %v1246 = vrot.slane %v1239, %v1245
        %v1248 = vunpack.c.l.s4 1966171168
        %v1249 = vunpack.c.0.s8 %v1248
        %v1250 = vlaneseq
        %v1251 = vshrl.u32 %v1250, 7
        %v1252 = vsub.s32 %v1249, %v1251
        %v1253 = vrot.slane %v1246, %v1252
        %v1255 = vadd.f32 %v1225, %v1253
        %1256 = vrot.lane.b32.xlu0 %v1001, 111
        %v1257 = vpop.permute.xlu0 %1256
        %1258 = vrot.lane.b32.xlu0 %v1008, 111
        %v1259 = vpop.permute.xlu0 %1258
        %vm1260 = vcmp.lt.s32.totalorder %v720, 111
        %v1261 = vsel %vm1260, %v1257, %v1259
        %v1262 = vsel %vm1260, %v1259, %v1257
        %vm1263 = vmand %vm1096, %vm1202
        %v1266 = vcombine.low %v1261, %v1262
        %v1268 = vunpack.c.l.s4 1966171168
        %v1269 = vunpack.c.0.s8 %v1268
        %v1270 = vlaneseq
        %v1271 = vshrl.u32 %v1270, 7
        %v1272 = vsub.s32 %v1269, %v1271
        %v1273 = vrot.slane %v1266, %v1272
        %v1275 = vunpack.c.l.s4 1966171168
        %v1276 = vunpack.c.0.s8 %v1275
        %v1277 = vlaneseq
        %v1278 = vshrl.u32 %v1277, 7
        %v1279 = vsub.s32 %v1276, %v1278
        %v1280 = vrot.slane %v1273, %v1279
        %v1282 = vsel %vm1263, %v1280, 0.0
        %v1283 = vadd.f32 %v1224, %v1282
        %v1284 = vadd.f32 %v1255, %v1282
        %v1286 = vcombine.high %v991, %v991
        %1288 = vst [vmem:[#allocation2] sm:$0xf] %v991
        %1289 = vst [vmem:[#allocation2 + $0x8] sm:$0xf] %v1286
        %v1290 = vlaneseq
        %vm1291 = vcmp.ge.s32.totalorder %v1290, 0
        %vm1292 = vcmp.lt.s32.totalorder %v1290, 256
        %vm1293 = vmand %vm1291, %vm1292
        %s1294 = scalar_lea.vmem [#allocation2], 4
        %1295 = vst.msk [vmem:[%s1294] ss:$8 sm:$0x3] %vm1293, %v1283
        %1296 = vst.msk [vmem:[%s1294] ss:$8 sm:$0x0] %vm1293, %v1283
        %s1297 = scalar_lea.vmem [#allocation2], 5
        %1298 = vst.msk [vmem:[%s1297] ss:$8 sm:$0x3] %vm1293, %v1284
        %1299 = vst.msk [vmem:[%s1297] ss:$8 sm:$0x0] %vm1293, %v1284
        %v1300 = vld [vmem:[#allocation2] sm:$0x3f]
        %v1301 = vld [vmem:[#allocation2 + $0x8] sm:$0x3f]
        %v1302 = vld [vmem:[#allocation19] sm:$0x3f]
        %1303 = vrot.lane.b32.xlu0 %v1300, 17
        %v1304 = vpop.permute.xlu0 %1303
        %1305 = vrot.lane.b32.xlu0 %v1301, 17
        %v1306 = vpop.permute.xlu0 %1305
        %v1307 = vsel %vm1013, %v1304, %v1306
        %v1308 = vsel %vm1013, %v1306, %v1304
        %v1309 = vsel %vm1037, 1, 0
        %v1310 = vlaneseq
        %v1311 = vshrl.u32 %v1310, 7
        %v1312 = vsub.s32 0, %v1311
        %v1313 = vrot.slane %v1309, %v1312
        %v1314 = vlaneseq
        %v1315 = vshrl.u32 %v1314, 7
        %v1316 = vsub.s32 1, %v1315
        %v1317 = vrot.slane %v1309, %v1316
        %vm1318 = vcmp.eq.s32.totalorder %v1313, 1
        %vm1319 = vcmp.eq.s32.totalorder %v1317, 1
        %v1320 = vsel %vm1318, %v1308, 0.0
        %v1321 = vsel %vm1319, %v1307, 0.0
        %s1322 = scalar_lea.vmem [#allocation19], 8
        %v1323 = vld [vmem:[%s1322] sm:$0x3f]
        %1324 = vrot.lane.b32.xlu0 %v1300, 16
        %v1325 = vpop.permute.xlu0 %1324
        %1326 = vrot.lane.b32.xlu0 %v1301, 16
        %v1327 = vpop.permute.xlu0 %1326
        %v1328 = vsel %vm1063, %v1325, %v1327
        %v1329 = vsel %vm1063, %v1327, %v1325
        %vm1330 = vcmp.eq.s32.totalorder %v1019, 1
        %vm1331 = vcmp.eq.s32.totalorder %v1020, 1
        %v1332 = vsel %vm1330, %v1329, 0.0
        %v1333 = vsel %vm1331, %v1328, 0.0
        %vm1334 = vcmask 48128
        %v1336 = vsel %vm1334, %v1323, 0
        %vm1338 = vcmask 1045504
        %v1340 = vsel %vm1338, %v1332, 0
        %v1343 = vsel %vm1338, %v1333, 0
        %1345 = vmatprep.subr.mxu0 %v1343
        %1346 = vmatpush1.msra.mxu0 %v1340
        %1347 = vmatprep.subr.mxu0 0.0
        %1348 = vmatpush1.msra.mxu0 0.0
        %1349 = vmatprep.subr.mxu0 0.0
        %1350 = vmatpush1.msra.mxu0 0.0
        %1351 = vmatprep.subr.mxu0 0.0
        %1352 = vmatpush1.msra.mxu0 0.0
        %1353 = vmatprep.subr.mxu0 0.0
        %1354 = vmatpush1.msra.mxu0 0.0
        %1355 = vmatprep.subr.mxu0 0.0
        %1356 = vmatpush1.msra.mxu0 0.0
        %1357 = vmatprep.subr.mxu0 0.0
        %1358 = vmatpush1.msra.mxu0 0.0
        %1359 = vmatprep.subr.mxu0 0.0
        %1360 = vmatpush1.msra.mxu0 0.0
        %1361 = vmatprep.subr.mxu0 0.0
        %1362 = vmatpush1.msra.mxu0 0.0
        %1363 = vmatprep.subr.mxu0 0.0
        %1364 = vmatpush1.msra.mxu0 0.0
        %1365 = vmatprep.subr.mxu0 0.0
        %1366 = vmatpush1.msra.mxu0 0.0
        %1367 = vmatprep.subr.mxu0 0.0
        %1368 = vmatpush1.msra.mxu0 0.0
        %1369 = vmatprep.subr.mxu0 0.0
        %1370 = vmatpush1.msra.mxu0 0.0
        %1371 = vmatprep.subr.mxu0 0.0
        %1372 = vmatpush1.msra.mxu0 0.0
        %1373 = vmatprep.subr.mxu0 0.0
        %1374 = vmatpush1.msra.mxu0 0.0
        %1375 = vmatprep.subr.mxu0 0.0
        %1376 = vmatpush1.msra.mxu0 0.0
        %1377 = vmatprep.subr.mxu0 0.0
        %1378 = vmatpush1.msra.mxu0 0.0
        %1379 = vmatprep.subr.mxu0 0.0
        %1380 = vmatpush1.msra.mxu0 0.0
        %1381 = vmatprep.subr.mxu0 0.0
        %1382 = vmatpush1.msra.mxu0 0.0
        %1383 = vmatprep.subr.mxu0 0.0
        %1384 = vmatpush1.msra.mxu0 0.0
        %1385 = vmatprep.subr.mxu0 0.0
        %1386 = vmatpush1.msra.mxu0 0.0
        %1387 = vmatprep.subr.mxu0 0.0
        %1388 = vmatpush1.msra.mxu0 0.0
        %1389 = vmatprep.subr.mxu0 0.0
        %1390 = vmatpush1.msra.mxu0 0.0
        %1391 = vmatprep.subr.mxu0 0.0
        %1392 = vmatpush1.msra.mxu0 0.0
        %1393 = vmatprep.subr.mxu0 0.0
        %1394 = vmatpush1.msra.mxu0 0.0
        %1395 = vmatprep.subr.mxu0 0.0
        %1396 = vmatpush1.msra.mxu0 0.0
        %1397 = vmatprep.subr.mxu0 0.0
        %1398 = vmatpush1.msra.mxu0 0.0
        %1399 = vmatprep.subr.mxu0 0.0
        %1400 = vmatpush1.msra.mxu0 0.0
        %1401 = vmatprep.subr.mxu0 0.0
        %1402 = vmatpush1.msra.mxu0 0.0
        %1403 = vmatprep.subr.mxu0 0.0
        %1404 = vmatpush1.msra.mxu0 0.0
        %1405 = vmatprep.subr.mxu0 0.0
        %1406 = vmatpush1.msra.mxu0 0.0
        %1407 = vmatprep.subr.mxu0 0.0
        %1408 = vmatpush1.msra.mxu0 0.0
        %1409 = vmatprep.mubr.f32.mxu0 0.0
        %1410 = vmatmul.mubr.f32.gmra.mrb[0].mxu0 %v1336
        %v1411 = vpop.f32.mrb[0].mxu0
        %v1412 = vadd.f32 0.0, %v1411
        %v1413 = vpop.f32.mrb[0].mxu0
        %v1414 = vadd.f32 0.0, %v1413
        %1415 = vdwg.mxu0
        %v1417 = vsel %vm1334, %v1302, 0
        %v1420 = vsel %vm1338, %v1320, 0
        %v1423 = vsel %vm1338, %v1321, 0
        %1425 = vmatprep.subr.mxu0 %v1423
        %1426 = vmatpush1.msra.mxu0 %v1420
        %1427 = vmatprep.subr.mxu0 0.0
        %1428 = vmatpush1.msra.mxu0 0.0
        %1429 = vmatprep.subr.mxu0 0.0
        %1430 = vmatpush1.msra.mxu0 0.0
        %1431 = vmatprep.subr.mxu0 0.0
        %1432 = vmatpush1.msra.mxu0 0.0
        %1433 = vmatprep.subr.mxu0 0.0
        %1434 = vmatpush1.msra.mxu0 0.0
        %1435 = vmatprep.subr.mxu0 0.0
        %1436 = vmatpush1.msra.mxu0 0.0
        %1437 = vmatprep.subr.mxu0 0.0
        %1438 = vmatpush1.msra.mxu0 0.0
        %1439 = vmatprep.subr.mxu0 0.0
        %1440 = vmatpush1.msra.mxu0 0.0
        %1441 = vmatprep.subr.mxu0 0.0
        %1442 = vmatpush1.msra.mxu0 0.0
        %1443 = vmatprep.subr.mxu0 0.0
        %1444 = vmatpush1.msra.mxu0 0.0
        %1445 = vmatprep.subr.mxu0 0.0
        %1446 = vmatpush1.msra.mxu0 0.0
        %1447 = vmatprep.subr.mxu0 0.0
        %1448 = vmatpush1.msra.mxu0 0.0
        %1449 = vmatprep.subr.mxu0 0.0
        %1450 = vmatpush1.msra.mxu0 0.0
        %1451 = vmatprep.subr.mxu0 0.0
        %1452 = vmatpush1.msra.mxu0 0.0
        %1453 = vmatprep.subr.mxu0 0.0
        %1454 = vmatpush1.msra.mxu0 0.0
        %1455 = vmatprep.subr.mxu0 0.0
        %1456 = vmatpush1.msra.mxu0 0.0
        %1457 = vmatprep.subr.mxu0 0.0
        %1458 = vmatpush1.msra.mxu0 0.0
        %1459 = vmatprep.subr.mxu0 0.0
        %1460 = vmatpush1.msra.mxu0 0.0
        %1461 = vmatprep.subr.mxu0 0.0
        %1462 = vmatpush1.msra.mxu0 0.0
        %1463 = vmatprep.subr.mxu0 0.0
        %1464 = vmatpush1.msra.mxu0 0.0
        %1465 = vmatprep.subr.mxu0 0.0
        %1466 = vmatpush1.msra.mxu0 0.0
        %1467 = vmatprep.subr.mxu0 0.0
        %1468 = vmatpush1.msra.mxu0 0.0
        %1469 = vmatprep.subr.mxu0 0.0
        %1470 = vmatpush1.msra.mxu0 0.0
        %1471 = vmatprep.subr.mxu0 0.0
        %1472 = vmatpush1.msra.mxu0 0.0
        %1473 = vmatprep.subr.mxu0 0.0
        %1474 = vmatpush1.msra.mxu0 0.0
        %1475 = vmatprep.subr.mxu0 0.0
        %1476 = vmatpush1.msra.mxu0 0.0
        %1477 = vmatprep.subr.mxu0 0.0
        %1478 = vmatpush1.msra.mxu0 0.0
        %1479 = vmatprep.subr.mxu0 0.0
        %1480 = vmatpush1.msra.mxu0 0.0
        %1481 = vmatprep.subr.mxu0 0.0
        %1482 = vmatpush1.msra.mxu0 0.0
        %1483 = vmatprep.subr.mxu0 0.0
        %1484 = vmatpush1.msra.mxu0 0.0
        %1485 = vmatprep.subr.mxu0 0.0
        %1486 = vmatpush1.msra.mxu0 0.0
        %1487 = vmatprep.subr.mxu0 0.0
        %1488 = vmatpush1.msra.mxu0 0.0
        %1489 = vmatprep.mubr.f32.mxu0 0.0
        %1490 = vmatmul.mubr.f32.gmra.mrb[0].mxu0 %v1417
        %v1491 = vpop.f32.mrb[0].mxu0
        %v1492 = vadd.f32 %v1412, %v1491
        %v1493 = vpop.f32.mrb[0].mxu0
        %v1494 = vadd.f32 %v1414, %v1493
        %1495 = vdwg.mxu0
        %s1496 = scalar_lea.vmem [#allocation19], 16
        %v1497 = vld [vmem:[%s1496] sm:$0x3f]
        %1498 = vrot.lane.b32.xlu0 %v1300, 15
        %v1499 = vpop.permute.xlu0 %1498
        %1500 = vrot.lane.b32.xlu0 %v1301, 15
        %v1501 = vpop.permute.xlu0 %1500
        %v1502 = vsel %vm1093, %v1499, %v1501
        %v1503 = vsel %vm1093, %v1501, %v1499
        %v1504 = vsel %vm1097, 1, 0
        %v1505 = vlaneseq
        %v1506 = vshrl.u32 %v1505, 7
        %v1507 = vsub.s32 0, %v1506
        %v1508 = vrot.slane %v1504, %v1507
        %v1509 = vlaneseq
        %v1510 = vshrl.u32 %v1509, 7
        %v1511 = vsub.s32 1, %v1510
        %v1512 = vrot.slane %v1504, %v1511
        %vm1513 = vcmp.eq.s32.totalorder %v1508, 1
        %vm1514 = vcmp.eq.s32.totalorder %v1512, 1
        %v1515 = vsel %vm1513, %v1503, 0.0
        %v1516 = vsel %vm1514, %v1502, 0.0
        %v1518 = vsel %vm1334, %v1497, 0
        %v1521 = vsel %vm1338, %v1515, 0
        %v1524 = vsel %vm1338, %v1516, 0
        %1526 = vmatprep.subr.mxu0 %v1524
        %1527 = vmatpush1.msra.mxu0 %v1521
        %1528 = vmatprep.subr.mxu0 0.0
        %1529 = vmatpush1.msra.mxu0 0.0
        %1530 = vmatprep.subr.mxu0 0.0
        %1531 = vmatpush1.msra.mxu0 0.0
        %1532 = vmatprep.subr.mxu0 0.0
        %1533 = vmatpush1.msra.mxu0 0.0
        %1534 = vmatprep.subr.mxu0 0.0
        %1535 = vmatpush1.msra.mxu0 0.0
        %1536 = vmatprep.subr.mxu0 0.0
        %1537 = vmatpush1.msra.mxu0 0.0
        %1538 = vmatprep.subr.mxu0 0.0
        %1539 = vmatpush1.msra.mxu0 0.0
        %1540 = vmatprep.subr.mxu0 0.0
        %1541 = vmatpush1.msra.mxu0 0.0
        %1542 = vmatprep.subr.mxu0 0.0
        %1543 = vmatpush1.msra.mxu0 0.0
        %1544 = vmatprep.subr.mxu0 0.0
        %1545 = vmatpush1.msra.mxu0 0.0
        %1546 = vmatprep.subr.mxu0 0.0
        %1547 = vmatpush1.msra.mxu0 0.0
        %1548 = vmatprep.subr.mxu0 0.0
        %1549 = vmatpush1.msra.mxu0 0.0
        %1550 = vmatprep.subr.mxu0 0.0
        %1551 = vmatpush1.msra.mxu0 0.0
        %1552 = vmatprep.subr.mxu0 0.0
        %1553 = vmatpush1.msra.mxu0 0.0
        %1554 = vmatprep.subr.mxu0 0.0
        %1555 = vmatpush1.msra.mxu0 0.0
        %1556 = vmatprep.subr.mxu0 0.0
        %1557 = vmatpush1.msra.mxu0 0.0
        %1558 = vmatprep.subr.mxu0 0.0
        %1559 = vmatpush1.msra.mxu0 0.0
        %1560 = vmatprep.subr.mxu0 0.0
        %1561 = vmatpush1.msra.mxu0 0.0
        %1562 = vmatprep.subr.mxu0 0.0
        %1563 = vmatpush1.msra.mxu0 0.0
        %1564 = vmatprep.subr.mxu0 0.0
        %1565 = vmatpush1.msra.mxu0 0.0
        %1566 = vmatprep.subr.mxu0 0.0
        %1567 = vmatpush1.msra.mxu0 0.0
        %1568 = vmatprep.subr.mxu0 0.0
        %1569 = vmatpush1.msra.mxu0 0.0
        %1570 = vmatprep.subr.mxu0 0.0
        %1571 = vmatpush1.msra.mxu0 0.0
        %1572 = vmatprep.subr.mxu0 0.0
        %1573 = vmatpush1.msra.mxu0 0.0
        %1574 = vmatprep.subr.mxu0 0.0
        %1575 = vmatpush1.msra.mxu0 0.0
        %1576 = vmatprep.subr.mxu0 0.0
        %1577 = vmatpush1.msra.mxu0 0.0
        %1578 = vmatprep.subr.mxu0 0.0
        %1579 = vmatpush1.msra.mxu0 0.0
        %1580 = vmatprep.subr.mxu0 0.0
        %1581 = vmatpush1.msra.mxu0 0.0
        %1582 = vmatprep.subr.mxu0 0.0
        %1583 = vmatpush1.msra.mxu0 0.0
        %1584 = vmatprep.subr.mxu0 0.0
        %1585 = vmatpush1.msra.mxu0 0.0
        %1586 = vmatprep.subr.mxu0 0.0
        %1587 = vmatpush1.msra.mxu0 0.0
        %1588 = vmatprep.subr.mxu0 0.0
        %1589 = vmatpush1.msra.mxu0 0.0
        %1590 = vmatprep.mubr.f32.mxu0 0.0
        %1591 = vmatmul.mubr.f32.gmra.mrb[0].mxu0 %v1518
        %v1592 = vpop.f32.mrb[0].mxu0
        %v1593 = vadd.f32 0.0, %v1592
        %v1594 = vpop.f32.mrb[0].mxu0
        %v1595 = vadd.f32 0.0, %v1594
        %1596 = vdwg.mxu0
        %v1597 = vadd.f32 %v1492, %v1593
        %v1598 = vadd.f32 %v1494, %v1595
        %s1599 = scalar_lea.vmem [#allocation19], 24
        %v1600 = vld [vmem:[%s1599] sm:$0x3f]
        %1601 = vrot.lane.b32.xlu0 %v1300, 1
        %v1602 = vpop.permute.xlu0 %1601
        %1603 = vrot.lane.b32.xlu0 %v1301, 1
        %v1604 = vpop.permute.xlu0 %1603
        %v1605 = vsel %vm1124, %v1602, %v1604
        %v1606 = vsel %vm1124, %v1604, %v1602
        %v1607 = vsel %vm1016, 1, 0
        %v1608 = vlaneseq
        %v1609 = vshrl.u32 %v1608, 7
        %v1610 = vsub.s32 0, %v1609
        %v1611 = vrot.slane %v1607, %v1610
        %v1612 = vlaneseq
        %v1613 = vshrl.u32 %v1612, 7
        %v1614 = vsub.s32 1, %v1613
        %v1615 = vrot.slane %v1607, %v1614
        %vm1616 = vcmp.eq.s32.totalorder %v1611, 1
        %vm1617 = vcmp.eq.s32.totalorder %v1615, 1
        %v1618 = vsel %vm1616, %v1606, 0.0
        %v1619 = vsel %vm1617, %v1605, 0.0
        %v1621 = vsel %vm1334, %v1600, 0
        %v1624 = vsel %vm1338, %v1618, 0
        %v1627 = vsel %vm1338, %v1619, 0
        %1629 = vmatprep.subr.mxu0 %v1627
        %1630 = vmatpush1.msra.mxu0 %v1624
        %1631 = vmatprep.subr.mxu0 0.0
        %1632 = vmatpush1.msra.mxu0 0.0
        %1633 = vmatprep.subr.mxu0 0.0
        %1634 = vmatpush1.msra.mxu0 0.0
        %1635 = vmatprep.subr.mxu0 0.0
        %1636 = vmatpush1.msra.mxu0 0.0
        %1637 = vmatprep.subr.mxu0 0.0
        %1638 = vmatpush1.msra.mxu0 0.0
        %1639 = vmatprep.subr.mxu0 0.0
        %1640 = vmatpush1.msra.mxu0 0.0
        %1641 = vmatprep.subr.mxu0 0.0
        %1642 = vmatpush1.msra.mxu0 0.0
        %1643 = vmatprep.subr.mxu0 0.0
        %1644 = vmatpush1.msra.mxu0 0.0
        %1645 = vmatprep.subr.mxu0 0.0
        %1646 = vmatpush1.msra.mxu0 0.0
        %1647 = vmatprep.subr.mxu0 0.0
        %1648 = vmatpush1.msra.mxu0 0.0
        %1649 = vmatprep.subr.mxu0 0.0
        %1650 = vmatpush1.msra.mxu0 0.0
        %1651 = vmatprep.subr.mxu0 0.0
        %1652 = vmatpush1.msra.mxu0 0.0
        %1653 = vmatprep.subr.mxu0 0.0
        %1654 = vmatpush1.msra.mxu0 0.0
        %1655 = vmatprep.subr.mxu0 0.0
        %1656 = vmatpush1.msra.mxu0 0.0
        %1657 = vmatprep.subr.mxu0 0.0
        %1658 = vmatpush1.msra.mxu0 0.0
        %1659 = vmatprep.subr.mxu0 0.0
        %1660 = vmatpush1.msra.mxu0 0.0
        %1661 = vmatprep.subr.mxu0 0.0
        %1662 = vmatpush1.msra.mxu0 0.0
        %1663 = vmatprep.subr.mxu0 0.0
        %1664 = vmatpush1.msra.mxu0 0.0
        %1665 = vmatprep.subr.mxu0 0.0
        %1666 = vmatpush1.msra.mxu0 0.0
        %1667 = vmatprep.subr.mxu0 0.0
        %1668 = vmatpush1.msra.mxu0 0.0
        %1669 = vmatprep.subr.mxu0 0.0
        %1670 = vmatpush1.msra.mxu0 0.0
        %1671 = vmatprep.subr.mxu0 0.0
        %1672 = vmatpush1.msra.mxu0 0.0
        %1673 = vmatprep.subr.mxu0 0.0
        %1674 = vmatpush1.msra.mxu0 0.0
        %1675 = vmatprep.subr.mxu0 0.0
        %1676 = vmatpush1.msra.mxu0 0.0
        %1677 = vmatprep.subr.mxu0 0.0
        %1678 = vmatpush1.msra.mxu0 0.0
        %1679 = vmatprep.subr.mxu0 0.0
        %1680 = vmatpush1.msra.mxu0 0.0
        %1681 = vmatprep.subr.mxu0 0.0
        %1682 = vmatpush1.msra.mxu0 0.0
        %1683 = vmatprep.subr.mxu0 0.0
        %1684 = vmatpush1.msra.mxu0 0.0
        %1685 = vmatprep.subr.mxu0 0.0
        %1686 = vmatpush1.msra.mxu0 0.0
        %1687 = vmatprep.subr.mxu0 0.0
        %1688 = vmatpush1.msra.mxu0 0.0
        %1689 = vmatprep.subr.mxu0 0.0
        %1690 = vmatpush1.msra.mxu0 0.0
        %1691 = vmatprep.subr.mxu0 0.0
        %1692 = vmatpush1.msra.mxu0 0.0
        %1693 = vmatprep.mubr.f32.mxu0 0.0
        %1694 = vmatmul.mubr.f32.gmra.mrb[0].mxu0 %v1621
        %v1695 = vpop.f32.mrb[0].mxu0
        %v1696 = vadd.f32 0.0, %v1695
        %v1697 = vpop.f32.mrb[0].mxu0
        %v1698 = vadd.f32 0.0, %v1697
        %1699 = vdwg.mxu0
        %v1700 = vadd.f32 %v1597, %v1696
        %v1701 = vadd.f32 %v1598, %v1698
        %s1702 = scalar_lea.vmem [#allocation19], 32
        %v1703 = vld [vmem:[%s1702] sm:$0x3f]
        %v1705 = vsel %vm1334, %v1703, 0
        %v1708 = vsel %vm1338, %v1300, 0
        %v1711 = vsel %vm1338, %v1301, 0
        %1713 = vmatprep.subr.mxu0 %v1711
        %1714 = vmatpush1.msra.mxu0 %v1708
        %1715 = vmatprep.subr.mxu0 0.0
        %1716 = vmatpush1.msra.mxu0 0.0
        %1717 = vmatprep.subr.mxu0 0.0
        %1718 = vmatpush1.msra.mxu0 0.0
        %1719 = vmatprep.subr.mxu0 0.0
        %1720 = vmatpush1.msra.mxu0 0.0
        %1721 = vmatprep.subr.mxu0 0.0
        %1722 = vmatpush1.msra.mxu0 0.0
        %1723 = vmatprep.subr.mxu0 0.0
        %1724 = vmatpush1.msra.mxu0 0.0
        %1725 = vmatprep.subr.mxu0 0.0
        %1726 = vmatpush1.msra.mxu0 0.0
        %1727 = vmatprep.subr.mxu0 0.0
        %1728 = vmatpush1.msra.mxu0 0.0
        %1729 = vmatprep.subr.mxu0 0.0
        %1730 = vmatpush1.msra.mxu0 0.0
        %1731 = vmatprep.subr.mxu0 0.0
        %1732 = vmatpush1.msra.mxu0 0.0
        %1733 = vmatprep.subr.mxu0 0.0
        %1734 = vmatpush1.msra.mxu0 0.0
        %1735 = vmatprep.subr.mxu0 0.0
        %1736 = vmatpush1.msra.mxu0 0.0
        %1737 = vmatprep.subr.mxu0 0.0
        %1738 = vmatpush1.msra.mxu0 0.0
        %1739 = vmatprep.subr.mxu0 0.0
        %1740 = vmatpush1.msra.mxu0 0.0
        %1741 = vmatprep.subr.mxu0 0.0
        %1742 = vmatpush1.msra.mxu0 0.0
        %1743 = vmatprep.subr.mxu0 0.0
        %1744 = vmatpush1.msra.mxu0 0.0
        %1745 = vmatprep.subr.mxu0 0.0
        %1746 = vmatpush1.msra.mxu0 0.0
        %1747 = vmatprep.subr.mxu0 0.0
        %1748 = vmatpush1.msra.mxu0 0.0
        %1749 = vmatprep.subr.mxu0 0.0
        %1750 = vmatpush1.msra.mxu0 0.0
        %1751 = vmatprep.subr.mxu0 0.0
        %1752 = vmatpush1.msra.mxu0 0.0
        %1753 = vmatprep.subr.mxu0 0.0
        %1754 = vmatpush1.msra.mxu0 0.0
        %1755 = vmatprep.subr.mxu0 0.0
        %1756 = vmatpush1.msra.mxu0 0.0
        %1757 = vmatprep.subr.mxu0 0.0
        %1758 = vmatpush1.msra.mxu0 0.0
        %1759 = vmatprep.subr.mxu0 0.0
        %1760 = vmatpush1.msra.mxu0 0.0
        %1761 = vmatprep.subr.mxu0 0.0
        %1762 = vmatpush1.msra.mxu0 0.0
        %1763 = vmatprep.subr.mxu0 0.0
        %1764 = vmatpush1.msra.mxu0 0.0
        %1765 = vmatprep.subr.mxu0 0.0
        %1766 = vmatpush1.msra.mxu0 0.0
        %1767 = vmatprep.subr.mxu0 0.0
        %1768 = vmatpush1.msra.mxu0 0.0
        %1769 = vmatprep.subr.mxu0 0.0
        %1770 = vmatpush1.msra.mxu0 0.0
        %1771 = vmatprep.subr.mxu0 0.0
        %1772 = vmatpush1.msra.mxu0 0.0
        %1773 = vmatprep.subr.mxu0 0.0
        %1774 = vmatpush1.msra.mxu0 0.0
        %1775 = vmatprep.subr.mxu0 0.0
        %1776 = vmatpush1.msra.mxu0 0.0
        %1777 = vmatprep.mubr.f32.mxu0 0.0
        %1778 = vmatmul.mubr.f32.gmra.mrb[0].mxu0 %v1705
        %v1779 = vpop.f32.mrb[0].mxu0
        %v1780 = vadd.f32 0.0, %v1779
        %v1781 = vpop.f32.mrb[0].mxu0
        %v1782 = vadd.f32 0.0, %v1781
        %1783 = vdwg.mxu0
        %v1784 = vadd.f32 %v1700, %v1780
        %v1785 = vadd.f32 %v1701, %v1782
        %s1786 = scalar_lea.vmem [#allocation19], 40
        %v1787 = vld [vmem:[%s1786] sm:$0x3f]
        %1788 = vrot.lane.b32.xlu0 %v1300, 127
        %v1789 = vpop.permute.xlu0 %1788
        %1790 = vrot.lane.b32.xlu0 %v1301, 127
        %v1791 = vpop.permute.xlu0 %1790
        %v1792 = vsel %vm1152, %v1789, %v1791
        %v1793 = vsel %vm1152, %v1791, %v1789
        %v1794 = vsel %vm1096, 1, 0
        %v1795 = vlaneseq
        %v1796 = vshrl.u32 %v1795, 7
        %v1797 = vsub.s32 0, %v1796
        %v1798 = vrot.slane %v1794, %v1797
        %v1799 = vlaneseq
        %v1800 = vshrl.u32 %v1799, 7
        %v1801 = vsub.s32 1, %v1800
        %v1802 = vrot.slane %v1794, %v1801
        %vm1803 = vcmp.eq.s32.totalorder %v1798, 1
        %vm1804 = vcmp.eq.s32.totalorder %v1802, 1
        %v1805 = vsel %vm1803, %v1792, 0.0
        %v1806 = vsel %vm1804, %v1793, 0.0
        %v1808 = vsel %vm1334, %v1787, 0
        %v1811 = vsel %vm1338, %v1805, 0
        %v1814 = vsel %vm1338, %v1806, 0
        %1816 = vmatprep.subr.mxu0 %v1814
        %1817 = vmatpush1.msra.mxu0 %v1811
        %1818 = vmatprep.subr.mxu0 0.0
        %1819 = vmatpush1.msra.mxu0 0.0
        %1820 = vmatprep.subr.mxu0 0.0
        %1821 = vmatpush1.msra.mxu0 0.0
        %1822 = vmatprep.subr.mxu0 0.0
        %1823 = vmatpush1.msra.mxu0 0.0
        %1824 = vmatprep.subr.mxu0 0.0
        %1825 = vmatpush1.msra.mxu0 0.0
        %1826 = vmatprep.subr.mxu0 0.0
        %1827 = vmatpush1.msra.mxu0 0.0
        %1828 = vmatprep.subr.mxu0 0.0
        %1829 = vmatpush1.msra.mxu0 0.0
        %1830 = vmatprep.subr.mxu0 0.0
        %1831 = vmatpush1.msra.mxu0 0.0
        %1832 = vmatprep.subr.mxu0 0.0
        %1833 = vmatpush1.msra.mxu0 0.0
        %1834 = vmatprep.subr.mxu0 0.0
        %1835 = vmatpush1.msra.mxu0 0.0
        %1836 = vmatprep.subr.mxu0 0.0
        %1837 = vmatpush1.msra.mxu0 0.0
        %1838 = vmatprep.subr.mxu0 0.0
        %1839 = vmatpush1.msra.mxu0 0.0
        %1840 = vmatprep.subr.mxu0 0.0
        %1841 = vmatpush1.msra.mxu0 0.0
        %1842 = vmatprep.subr.mxu0 0.0
        %1843 = vmatpush1.msra.mxu0 0.0
        %1844 = vmatprep.subr.mxu0 0.0
        %1845 = vmatpush1.msra.mxu0 0.0
        %1846 = vmatprep.subr.mxu0 0.0
        %1847 = vmatpush1.msra.mxu0 0.0
        %1848 = vmatprep.subr.mxu0 0.0
        %1849 = vmatpush1.msra.mxu0 0.0
        %1850 = vmatprep.subr.mxu0 0.0
        %1851 = vmatpush1.msra.mxu0 0.0
        %1852 = vmatprep.subr.mxu0 0.0
        %1853 = vmatpush1.msra.mxu0 0.0
        %1854 = vmatprep.subr.mxu0 0.0
        %1855 = vmatpush1.msra.mxu0 0.0
        %1856 = vmatprep.subr.mxu0 0.0
        %1857 = vmatpush1.msra.mxu0 0.0
        %1858 = vmatprep.subr.mxu0 0.0
        %1859 = vmatpush1.msra.mxu0 0.0
        %1860 = vmatprep.subr.mxu0 0.0
        %1861 = vmatpush1.msra.mxu0 0.0
        %1862 = vmatprep.subr.mxu0 0.0
        %1863 = vmatpush1.msra.mxu0 0.0
        %1864 = vmatprep.subr.mxu0 0.0
        %1865 = vmatpush1.msra.mxu0 0.0
        %1866 = vmatprep.subr.mxu0 0.0
        %1867 = vmatpush1.msra.mxu0 0.0
        %1868 = vmatprep.subr.mxu0 0.0
        %1869 = vmatpush1.msra.mxu0 0.0
        %1870 = vmatprep.subr.mxu0 0.0
        %1871 = vmatpush1.msra.mxu0 0.0
        %1872 = vmatprep.subr.mxu0 0.0
        %1873 = vmatpush1.msra.mxu0 0.0
        %1874 = vmatprep.subr.mxu0 0.0
        %1875 = vmatpush1.msra.mxu0 0.0
        %1876 = vmatprep.subr.mxu0 0.0
        %1877 = vmatpush1.msra.mxu0 0.0
        %1878 = vmatprep.subr.mxu0 0.0
        %1879 = vmatpush1.msra.mxu0 0.0
        %1880 = vmatprep.mubr.f32.mxu0 0.0
        %1881 = vmatmul.mubr.f32.gmra.mrb[0].mxu0 %v1808
        %v1882 = vpop.f32.mrb[0].mxu0
        %v1883 = vadd.f32 0.0, %v1882
        %v1884 = vpop.f32.mrb[0].mxu0
        %v1885 = vadd.f32 0.0, %v1884
        %1886 = vdwg.mxu0
        %v1887 = vadd.f32 %v1784, %v1883
        %v1888 = vadd.f32 %v1785, %v1885
        %s1889 = scalar_lea.vmem [#allocation19], 48
        %v1890 = vld [vmem:[%s1889] sm:$0x3f]
        %1891 = vrot.lane.b32.xlu0 %v1300, 113
        %v1892 = vpop.permute.xlu0 %1891
        %1893 = vrot.lane.b32.xlu0 %v1301, 113
        %v1894 = vpop.permute.xlu0 %1893
        %v1895 = vsel %vm1180, %v1892, %v1894
        %v1896 = vsel %vm1180, %v1894, %v1892
        %v1897 = vsel %vm1203, 1, 0
        %v1898 = vlaneseq
        %v1899 = vshrl.u32 %v1898, 7
        %v1900 = vsub.s32 0, %v1899
        %v1901 = vrot.slane %v1897, %v1900
        %v1902 = vlaneseq
        %v1903 = vshrl.u32 %v1902, 7
        %v1904 = vsub.s32 1, %v1903
        %v1905 = vrot.slane %v1897, %v1904
        %vm1906 = vcmp.eq.s32.totalorder %v1901, 1
        %vm1907 = vcmp.eq.s32.totalorder %v1905, 1
        %v1908 = vsel %vm1906, %v1895, 0.0
        %v1909 = vsel %vm1907, %v1896, 0.0
        %v1911 = vsel %vm1334, %v1890, 0
        %v1914 = vsel %vm1338, %v1908, 0
        %v1917 = vsel %vm1338, %v1909, 0
        %1919 = vmatprep.subr.mxu0 %v1917
        %1920 = vmatpush1.msra.mxu0 %v1914
        %1921 = vmatprep.subr.mxu0 0.0
        %1922 = vmatpush1.msra.mxu0 0.0
        %1923 = vmatprep.subr.mxu0 0.0
        %1924 = vmatpush1.msra.mxu0 0.0
        %1925 = vmatprep.subr.mxu0 0.0
        %1926 = vmatpush1.msra.mxu0 0.0
        %1927 = vmatprep.subr.mxu0 0.0
        %1928 = vmatpush1.msra.mxu0 0.0
        %1929 = vmatprep.subr.mxu0 0.0
        %1930 = vmatpush1.msra.mxu0 0.0
        %1931 = vmatprep.subr.mxu0 0.0
        %1932 = vmatpush1.msra.mxu0 0.0
        %1933 = vmatprep.subr.mxu0 0.0
        %1934 = vmatpush1.msra.mxu0 0.0
        %1935 = vmatprep.subr.mxu0 0.0
        %1936 = vmatpush1.msra.mxu0 0.0
        %1937 = vmatprep.subr.mxu0 0.0
        %1938 = vmatpush1.msra.mxu0 0.0
        %1939 = vmatprep.subr.mxu0 0.0
        %1940 = vmatpush1.msra.mxu0 0.0
        %1941 = vmatprep.subr.mxu0 0.0
        %1942 = vmatpush1.msra.mxu0 0.0
        %1943 = vmatprep.subr.mxu0 0.0
        %1944 = vmatpush1.msra.mxu0 0.0
        %1945 = vmatprep.subr.mxu0 0.0
        %1946 = vmatpush1.msra.mxu0 0.0
        %1947 = vmatprep.subr.mxu0 0.0
        %1948 = vmatpush1.msra.mxu0 0.0
        %1949 = vmatprep.subr.mxu0 0.0
        %1950 = vmatpush1.msra.mxu0 0.0
        %1951 = vmatprep.subr.mxu0 0.0
        %1952 = vmatpush1.msra.mxu0 0.0
        %1953 = vmatprep.subr.mxu0 0.0
        %1954 = vmatpush1.msra.mxu0 0.0
        %1955 = vmatprep.subr.mxu0 0.0
        %1956 = vmatpush1.msra.mxu0 0.0
        %1957 = vmatprep.subr.mxu0 0.0
        %1958 = vmatpush1.msra.mxu0 0.0
        %1959 = vmatprep.subr.mxu0 0.0
        %1960 = vmatpush1.msra.mxu0 0.0
        %1961 = vmatprep.subr.mxu0 0.0
        %1962 = vmatpush1.msra.mxu0 0.0
        %1963 = vmatprep.subr.mxu0 0.0
        %1964 = vmatpush1.msra.mxu0 0.0
        %1965 = vmatprep.subr.mxu0 0.0
        %1966 = vmatpush1.msra.mxu0 0.0
        %1967 = vmatprep.subr.mxu0 0.0
        %1968 = vmatpush1.msra.mxu0 0.0
        %1969 = vmatprep.subr.mxu0 0.0
        %1970 = vmatpush1.msra.mxu0 0.0
        %1971 = vmatprep.subr.mxu0 0.0
        %1972 = vmatpush1.msra.mxu0 0.0
        %1973 = vmatprep.subr.mxu0 0.0
        %1974 = vmatpush1.msra.mxu0 0.0
        %1975 = vmatprep.subr.mxu0 0.0
        %1976 = vmatpush1.msra.mxu0 0.0
        %1977 = vmatprep.subr.mxu0 0.0
        %1978 = vmatpush1.msra.mxu0 0.0
        %1979 = vmatprep.subr.mxu0 0.0
        %1980 = vmatpush1.msra.mxu0 0.0
        %1981 = vmatprep.subr.mxu0 0.0
        %1982 = vmatpush1.msra.mxu0 0.0
        %1983 = vmatprep.mubr.f32.mxu0 0.0
        %1984 = vmatmul.mubr.f32.gmra.mrb[0].mxu0 %v1911
        %v1985 = vpop.f32.mrb[0].mxu0
        %v1986 = vadd.f32 0.0, %v1985
        %v1987 = vpop.f32.mrb[0].mxu0
        %v1988 = vadd.f32 0.0, %v1987
        %1989 = vdwg.mxu0
        %v1990 = vadd.f32 %v1887, %v1986
        %v1991 = vadd.f32 %v1888, %v1988
        %s1992 = scalar_lea.vmem [#allocation19], 56
        %v1993 = vld [vmem:[%s1992] sm:$0x3f]
        %1994 = vrot.lane.b32.xlu0 %v1300, 112
        %v1995 = vpop.permute.xlu0 %1994
        %1996 = vrot.lane.b32.xlu0 %v1301, 112
        %v1997 = vpop.permute.xlu0 %1996
        %v1998 = vsel %vm1230, %v1995, %v1997
        %v1999 = vsel %vm1230, %v1997, %v1995
        %vm2000 = vcmp.eq.s32.totalorder %v1185, 1
        %vm2001 = vcmp.eq.s32.totalorder %v1186, 1
        %v2002 = vsel %vm2000, %v1998, 0.0
        %v2003 = vsel %vm2001, %v1999, 0.0
        %v2005 = vsel %vm1334, %v1993, 0
        %v2008 = vsel %vm1338, %v2002, 0
        %v2011 = vsel %vm1338, %v2003, 0
        %2013 = vmatprep.subr.mxu0 %v2011
        %2014 = vmatpush1.msra.mxu0 %v2008
        %2015 = vmatprep.subr.mxu0 0.0
        %2016 = vmatpush1.msra.mxu0 0.0
        %2017 = vmatprep.subr.mxu0 0.0
        %2018 = vmatpush1.msra.mxu0 0.0
        %2019 = vmatprep.subr.mxu0 0.0
        %2020 = vmatpush1.msra.mxu0 0.0
        %2021 = vmatprep.subr.mxu0 0.0
        %2022 = vmatpush1.msra.mxu0 0.0
        %2023 = vmatprep.subr.mxu0 0.0
        %2024 = vmatpush1.msra.mxu0 0.0
        %2025 = vmatprep.subr.mxu0 0.0
        %2026 = vmatpush1.msra.mxu0 0.0
        %2027 = vmatprep.subr.mxu0 0.0
        %2028 = vmatpush1.msra.mxu0 0.0
        %2029 = vmatprep.subr.mxu0 0.0
        %2030 = vmatpush1.msra.mxu0 0.0
        %2031 = vmatprep.subr.mxu0 0.0
        %2032 = vmatpush1.msra.mxu0 0.0
        %2033 = vmatprep.subr.mxu0 0.0
        %2034 = vmatpush1.msra.mxu0 0.0
        %2035 = vmatprep.subr.mxu0 0.0
        %2036 = vmatpush1.msra.mxu0 0.0
        %2037 = vmatprep.subr.mxu0 0.0
        %2038 = vmatpush1.msra.mxu0 0.0
        %2039 = vmatprep.subr.mxu0 0.0
        %2040 = vmatpush1.msra.mxu0 0.0
        %2041 = vmatprep.subr.mxu0 0.0
        %2042 = vmatpush1.msra.mxu0 0.0
        %2043 = vmatprep.subr.mxu0 0.0
        %2044 = vmatpush1.msra.mxu0 0.0
        %2045 = vmatprep.subr.mxu0 0.0
        %2046 = vmatpush1.msra.mxu0 0.0
        %2047 = vmatprep.subr.mxu0 0.0
        %2048 = vmatpush1.msra.mxu0 0.0
        %2049 = vmatprep.subr.mxu0 0.0
        %2050 = vmatpush1.msra.mxu0 0.0
        %2051 = vmatprep.subr.mxu0 0.0
        %2052 = vmatpush1.msra.mxu0 0.0
        %2053 = vmatprep.subr.mxu0 0.0
        %2054 = vmatpush1.msra.mxu0 0.0
        %2055 = vmatprep.subr.mxu0 0.0
        %2056 = vmatpush1.msra.mxu0 0.0
        %2057 = vmatprep.subr.mxu0 0.0
        %2058 = vmatpush1.msra.mxu0 0.0
        %2059 = vmatprep.subr.mxu0 0.0
        %2060 = vmatpush1.msra.mxu0 0.0
        %2061 = vmatprep.subr.mxu0 0.0
        %2062 = vmatpush1.msra.mxu0 0.0
        %2063 = vmatprep.subr.mxu0 0.0
        %2064 = vmatpush1.msra.mxu0 0.0
        %2065 = vmatprep.subr.mxu0 0.0
        %2066 = vmatpush1.msra.mxu0 0.0
        %2067 = vmatprep.subr.mxu0 0.0
        %2068 = vmatpush1.msra.mxu0 0.0
        %2069 = vmatprep.subr.mxu0 0.0
        %2070 = vmatpush1.msra.mxu0 0.0
        %2071 = vmatprep.subr.mxu0 0.0
        %2072 = vmatpush1.msra.mxu0 0.0
        %2073 = vmatprep.subr.mxu0 0.0
        %2074 = vmatpush1.msra.mxu0 0.0
        %2075 = vmatprep.subr.mxu0 0.0
        %2076 = vmatpush1.msra.mxu0 0.0
        %2077 = vmatprep.mubr.f32.mxu0 0.0
        %2078 = vmatmul.mubr.f32.gmra.mrb[0].mxu0 %v2005
        %v2079 = vpop.f32.mrb[0].mxu0
        %v2080 = vadd.f32 0.0, %v2079
        %v2081 = vpop.f32.mrb[0].mxu0
        %v2082 = vadd.f32 0.0, %v2081
        %2083 = vdwg.mxu0
        %v2084 = vadd.f32 %v1990, %v2080
        %v2085 = vadd.f32 %v1991, %v2082
        %s2086 = scalar_lea.vmem [#allocation19], 64
        %v2087 = vld [vmem:[%s2086] sm:$0x3f]
        %2088 = vrot.lane.b32.xlu0 %v1300, 111
        %v2089 = vpop.permute.xlu0 %2088
        %2090 = vrot.lane.b32.xlu0 %v1301, 111
        %v2091 = vpop.permute.xlu0 %2090
        %v2092 = vsel %vm1260, %v2089, %v2091
        %v2093 = vsel %vm1260, %v2091, %v2089
        %v2094 = vsel %vm1263, 1, 0
        %v2095 = vlaneseq
        %v2096 = vshrl.u32 %v2095, 7
        %v2097 = vsub.s32 0, %v2096
        %v2098 = vrot.slane %v2094, %v2097
        %v2099 = vlaneseq
        %v2100 = vshrl.u32 %v2099, 7
        %v2101 = vsub.s32 1, %v2100
        %v2102 = vrot.slane %v2094, %v2101
        %vm2103 = vcmp.eq.s32.totalorder %v2098, 1
        %vm2104 = vcmp.eq.s32.totalorder %v2102, 1
        %v2105 = vsel %vm2103, %v2092, 0.0
        %v2106 = vsel %vm2104, %v2093, 0.0
        %v2108 = vsel %vm1334, %v2087, 0
        %v2111 = vsel %vm1338, %v2105, 0
        %v2114 = vsel %vm1338, %v2106, 0
        %2116 = vmatprep.subr.mxu0 %v2114
        %2117 = vmatpush1.msra.mxu0 %v2111
        %2118 = vmatprep.subr.mxu0 0.0
        %2119 = vmatpush1.msra.mxu0 0.0
        %2120 = vmatprep.subr.mxu0 0.0
        %2121 = vmatpush1.msra.mxu0 0.0
        %2122 = vmatprep.subr.mxu0 0.0
        %2123 = vmatpush1.msra.mxu0 0.0
        %2124 = vmatprep.subr.mxu0 0.0
        %2125 = vmatpush1.msra.mxu0 0.0
        %2126 = vmatprep.subr.mxu0 0.0
        %2127 = vmatpush1.msra.mxu0 0.0
        %2128 = vmatprep.subr.mxu0 0.0
        %2129 = vmatpush1.msra.mxu0 0.0
        %2130 = vmatprep.subr.mxu0 0.0
        %2131 = vmatpush1.msra.mxu0 0.0
        %2132 = vmatprep.subr.mxu0 0.0
        %2133 = vmatpush1.msra.mxu0 0.0
        %2134 = vmatprep.subr.mxu0 0.0
        %2135 = vmatpush1.msra.mxu0 0.0
        %2136 = vmatprep.subr.mxu0 0.0
        %2137 = vmatpush1.msra.mxu0 0.0
        %2138 = vmatprep.subr.mxu0 0.0
        %2139 = vmatpush1.msra.mxu0 0.0
        %2140 = vmatprep.subr.mxu0 0.0
        %2141 = vmatpush1.msra.mxu0 0.0
        %2142 = vmatprep.subr.mxu0 0.0
        %2143 = vmatpush1.msra.mxu0 0.0
        %2144 = vmatprep.subr.mxu0 0.0
        %2145 = vmatpush1.msra.mxu0 0.0
        %2146 = vmatprep.subr.mxu0 0.0
        %2147 = vmatpush1.msra.mxu0 0.0
        %2148 = vmatprep.subr.mxu0 0.0
        %2149 = vmatpush1.msra.mxu0 0.0
        %2150 = vmatprep.subr.mxu0 0.0
        %2151 = vmatpush1.msra.mxu0 0.0
        %2152 = vmatprep.subr.mxu0 0.0
        %2153 = vmatpush1.msra.mxu0 0.0
        %2154 = vmatprep.subr.mxu0 0.0
        %2155 = vmatpush1.msra.mxu0 0.0
        %2156 = vmatprep.subr.mxu0 0.0
        %2157 = vmatpush1.msra.mxu0 0.0
        %2158 = vmatprep.subr.mxu0 0.0
        %2159 = vmatpush1.msra.mxu0 0.0
        %2160 = vmatprep.subr.mxu0 0.0
        %2161 = vmatpush1.msra.mxu0 0.0
        %2162 = vmatprep.subr.mxu0 0.0
        %2163 = vmatpush1.msra.mxu0 0.0
        %2164 = vmatprep.subr.mxu0 0.0
        %2165 = vmatpush1.msra.mxu0 0.0
        %2166 = vmatprep.subr.mxu0 0.0
        %2167 = vmatpush1.msra.mxu0 0.0
        %2168 = vmatprep.subr.mxu0 0.0
        %2169 = vmatpush1.msra.mxu0 0.0
        %2170 = vmatprep.subr.mxu0 0.0
        %2171 = vmatpush1.msra.mxu0 0.0
        %2172 = vmatprep.subr.mxu0 0.0
        %2173 = vmatpush1.msra.mxu0 0.0
        %2174 = vmatprep.subr.mxu0 0.0
        %2175 = vmatpush1.msra.mxu0 0.0
        %2176 = vmatprep.subr.mxu0 0.0
        %2177 = vmatpush1.msra.mxu0 0.0
        %2178 = vmatprep.subr.mxu0 0.0
        %2179 = vmatpush1.msra.mxu0 0.0
        %2180 = vmatprep.mubr.f32.mxu0 0.0
        %2181 = vmatmul.mubr.f32.gmra.mrb[0].mxu0 %v2108
        %v2182 = vpop.f32.mrb[0].mxu0
        %v2183 = vadd.f32 0.0, %v2182
        %v2184 = vpop.f32.mrb[0].mxu0
        %v2185 = vadd.f32 0.0, %v2184
        %2186 = vdwg.mxu0
        %v2187 = vadd.f32 %v2084, %v2183
        %v2188 = vadd.f32 %v2085, %v2185
        %v2189 = vld [vmem:[#allocation21] sm:$0x3f]
        %2191 = vset.pattern.permute.xlu0 0
        %2192 = vperm.xlu0 %2191, %v2189
        %v2193 = vpop.permute.xlu0 %2192
        %v2195 = vmul.f32 %v2187, %v2193
        %v2196 = vmul.f32 %v2188, %v2193
        %v2197 = vld [vmem:[#allocation22] sm:$0x3f]
        %2199 = vset.pattern.permute.xlu0 0
        %2200 = vperm.xlu0 %2199, %v2197
        %v2201 = vpop.permute.xlu0 %2200
        %v2203 = vadd.f32 %v2195, %v2201
        %v2204 = vadd.f32 %v2196, %v2201
        %v2205 = vmax.f32 %v2203, 0.0
        %v2206 = vmax.f32 %v2204, 0.0
        %v2207 = vsel %vm1338, %v2205, 0.0
        %v2208 = vsel %vm1338, %v2206, 0.0
        %v2209 = vadd.f32 %v2207, %v2208
        %2210 = vadd.xlane.f32.xlu0 %v2209
        %v2211 = vpop.xlane.xlu0 %2210
        %v2212 = vrcp.pop 256.0
        %v2213 = vmul.f32 %v2211, %v2212
        %v2214 = vld [vmem:[#allocation24] sm:$0x3f]
        %v2216 = vsel %vm1334, %v2214, 0
        %v2219 = vsel %vm1338, %v2213, 0
        %2221 = vmatprep.subr.mxu0 0.0
        %2222 = vmatpush1.msra.mxu0 %v2219
        %2223 = vmatprep.subr.mxu0 0.0
        %2224 = vmatpush1.msra.mxu0 0.0
        %2225 = vmatprep.subr.mxu0 0.0
        %2226 = vmatpush1.msra.mxu0 0.0
        %2227 = vmatprep.subr.mxu0 0.0
        %2228 = vmatpush1.msra.mxu0 0.0
        %2229 = vmatprep.subr.mxu0 0.0
        %2230 = vmatpush1.msra.mxu0 0.0
        %2231 = vmatprep.subr.mxu0 0.0
        %2232 = vmatpush1.msra.mxu0 0.0
        %2233 = vmatprep.subr.mxu0 0.0
        %2234 = vmatpush1.msra.mxu0 0.0
        %2235 = vmatprep.subr.mxu0 0.0
        %2236 = vmatpush1.msra.mxu0 0.0
        %2237 = vmatprep.subr.mxu0 0.0
        %2238 = vmatpush1.msra.mxu0 0.0
        %2239 = vmatprep.subr.mxu0 0.0
        %2240 = vmatpush1.msra.mxu0 0.0
        %2241 = vmatprep.subr.mxu0 0.0
        %2242 = vmatpush1.msra.mxu0 0.0
        %2243 = vmatprep.subr.mxu0 0.0
        %2244 = vmatpush1.msra.mxu0 0.0
        %2245 = vmatprep.subr.mxu0 0.0
        %2246 = vmatpush1.msra.mxu0 0.0
        %2247 = vmatprep.subr.mxu0 0.0
        %2248 = vmatpush1.msra.mxu0 0.0
        %2249 = vmatprep.subr.mxu0 0.0
        %2250 = vmatpush1.msra.mxu0 0.0
        %2251 = vmatprep.subr.mxu0 0.0
        %2252 = vmatpush1.msra.mxu0 0.0
        %2253 = vmatprep.subr.mxu0 0.0
        %2254 = vmatpush1.msra.mxu0 0.0
        %2255 = vmatprep.subr.mxu0 0.0
        %2256 = vmatpush1.msra.mxu0 0.0
        %2257 = vmatprep.subr.mxu0 0.0
        %2258 = vmatpush1.msra.mxu0 0.0
        %2259 = vmatprep.subr.mxu0 0.0
        %2260 = vmatpush1.msra.mxu0 0.0
        %2261 = vmatprep.subr.mxu0 0.0
        %2262 = vmatpush1.msra.mxu0 0.0
        %2263 = vmatprep.subr.mxu0 0.0
        %2264 = vmatpush1.msra.mxu0 0.0
        %2265 = vmatprep.subr.mxu0 0.0
        %2266 = vmatpush1.msra.mxu0 0.0
        %2267 = vmatprep.subr.mxu0 0.0
        %2268 = vmatpush1.msra.mxu0 0.0
        %2269 = vmatprep.subr.mxu0 0.0
        %2270 = vmatpush1.msra.mxu0 0.0
        %2271 = vmatprep.subr.mxu0 0.0
        %2272 = vmatpush1.msra.mxu0 0.0
        %2273 = vmatprep.subr.mxu0 0.0
        %2274 = vmatpush1.msra.mxu0 0.0
        %2275 = vmatprep.subr.mxu0 0.0
        %2276 = vmatpush1.msra.mxu0 0.0
        %2277 = vmatprep.subr.mxu0 0.0
        %2278 = vmatpush1.msra.mxu0 0.0
        %2279 = vmatprep.subr.mxu0 0.0
        %2280 = vmatpush1.msra.mxu0 0.0
        %2281 = vmatprep.subr.mxu0 0.0
        %2282 = vmatpush1.msra.mxu0 0.0
        %2283 = vmatprep.subr.mxu0 0.0
        %2284 = vmatpush1.msra.mxu0 0.0
        %2285 = vmatprep.mubr.f32.mxu0 0.0
        %2286 = vmatmul.mubr.f32.gmra.mrb[0].mxu0 %v2216
        %v2287 = vpop.f32.mrb[0].mxu0
        %v2288 = vadd.f32 0.0, %v2287
        %v2289 = vpop.f32.mrb[0].mxu0
        %2290 = vdwg.mxu0
        %v2291 = vld [vmem:[#allocation25] sm:$0x3f]
        %v2292 = vmul.f32 %v2288, %v2291
        %v2293 = vld [vmem:[#allocation27] sm:$0x3f]
        %v2294 = vadd.f32 %v2292, %v2293
        %v2295 = vxor.u32 %v2294, 2147483648
        %v2296 = vmul.f32 %v2295, 1.442695
        %v2297 = vpow.pop %v2296
        %v2298 = vadd.f32 %v2297, 1.0
        %v2299 = vrcp.pop %v2298
        %v2300 = vmul.f32 1.0, %v2299
        %2302 = vset.pattern.permute.xlu0 0
        %2303 = vperm.xlu0 %2302, %v2300
        %v2304 = vpop.permute.xlu0 %2303
        %v2306 = vmul.f32 %v2205, %v2304
        %v2307 = vmul.f32 %v2206, %v2304
        %v2308 = vadd.f32 %v2306, %v1300
        %v2309 = vadd.f32 %v2307, %v1301
        %2310 = vst [vmem:[%s716] sm:$0x3f] %v2308
        %2311 = vst [vmem:[%s716 + $0x8] sm:$0x3f] %v2309
        %s2312 = sand.u32 %s391, 1
        %s2313 = scalar_lea.sflag [#allocation6], %s2312
        %s2314 = sand.u32 %s391, 1
        %s2315 = smul.addr %s2314, 16
        %s2316 = scalar_lea.vmem [#allocation28], %s2315
        // Predicated region
        $region145: #{tpu_custom_call.1} parent=83 // pred_check
          %p2317 = pneg %p401
        $region146: #{tpu_custom_call.1} parent=83 // pred_check_branch
          %2319 = sbr.rel (%p2317) target = $region148
        $region147: #{tpu_custom_call.1} parent=83 // pred_region
          %s2321 = ssub.s32 256, 256
          %2322 = vsyncadd %s2313, %s2321
          %s2323 = smul.addr %s42, 2
          %s2324 = smul.addr %s2323, 128
          %s2325 = scalar_lea.hbm %s16, %s2324
          %s2327 = sshll.u32 %s2316, 4
          %s2328 = int_to_ptr.vmem [resolvable:$true] %s2327
          %2330 = dma.vmem_to_hbm [thread:$0]  %s2328, 256, %s2325, %s2313
        $region148: #{tpu_custom_call.1} parent=83 // pred_fallthru
          _
      $region84: #{tpu_custom_call.1} parent=5 // pred_fallthru
        _
      %p2331 = scmp.le.s32.totalorder 2, %s37
      // Predicated region
      $region149: #{tpu_custom_call.1} parent=5 // pred_check
        %p2332 = pneg %p2331
      $region150: #{tpu_custom_call.1} parent=5 // pred_check_branch
        %2334 = sbr.rel (%p2332) target = $region152
      $region151: #{tpu_custom_call.1} parent=5 // pred_region
        %s2335 = ssub.s32 %s37, 2
        // Predicated region
        $region153: #{tpu_custom_call.1} parent=151 // pred_check
          %p2336 = pneg %p407
        $region154: #{tpu_custom_call.1} parent=151 // pred_check_branch
          %2338 = sbr.rel (%p2336) target = $region156
        $region155: #{tpu_custom_call.1} parent=151 // pred_region
          %s2339 = sand.u32 %s392, 1
          %s2340 = scalar_lea.sflag [#allocation6], %s2339
          %s2341 = sand.u32 %s392, 1
          %s2342 = smul.addr %s2341, 16
          %s2343 = scalar_lea.vmem [#allocation28], %s2342
          %2344 = dma.done %s2340, 256
        $region156: #{tpu_custom_call.1} parent=151 // pred_fallthru
          _
      $region152: #{tpu_custom_call.1} parent=5 // pred_fallthru
        _
    $region6: #{tpu_custom_call.1} parent=1 // loop_footer
      %s41 = sadd.s32 1, %s37
    $region7: #{tpu_custom_call.1} parent=1 // loop_footer_branch
      %36 = sbr.rel target = $region3
    $region8: #{tpu_custom_call.1} parent=1 // loop_exit
      _
    %2345 = vsyncpa [#allocation5], 1
    %s2346 = scalar_lea.sflag [#allocation5], 1
    %2347 = vsyncpa %s2346, 1
    %2348 = vsyncpa [#allocation8], 1
    %2349 = vsyncpa [#allocation11], 1
    %2350 = vsyncpa [#allocation14], 1
    %2351 = vsyncpa [#allocation17], 1
    %2352 = vsyncpa [#allocation20], 1
    %2353 = vsyncpa [#allocation23], 1
    %2354 = vsyncpa [#allocation26], 1
    %2355 = vsyncpa [#allocation6], 1
    %s2356 = scalar_lea.sflag [#allocation6], 1
    %2357 = vsyncpa %s2356, 1

</llo_original>
